<compile_context>
chip_gen: v6e
topology: v6e:2x2x1
jax: 0.10.0
libtpu: 0.0.40
codegen_flags: <defaults>
</compile_context>

<pallas_src>
import jax
import jax.numpy as jnp
from jax.experimental import pallas as pl
from jax.experimental.pallas import tpu as pltpu

# ----------------------------------------------------------------------------
# Model dimensions (small, consistent with the module: input_dim = C*H*W).
# ----------------------------------------------------------------------------
B, C, H, W = 2, 3, 16, 16
INPUT_DIM = C * H * W          # 768
INTER_DIM = 256
LATENT_DIM = 64
SUBLANE = 8                    # f32 sublane tile


# ----------------------------------------------------------------------------
# Fully fused VAE forward kernel.
#   inputs : x [MP, INPUT_DIM] f32, eps [MP, LATENT_DIM] f32,
#            w1 [INPUT_DIM, INTER_DIM] bf16, b1 [1, INTER_DIM] f32,
#            w2 [INTER_DIM, 2*LATENT]  bf16, b2 [1, 2*LATENT]  f32,
#            w3 [LATENT, INTER_DIM]    bf16, b3 [1, INTER_DIM] f32,
#            w4 [INTER_DIM, INPUT_DIM] bf16, b4 [1, INPUT_DIM] f32
#   outputs: h  [MP, 2*LATENT] f32   (mu || logvar, lane-dense 128)
#            recon [MP, INPUT_DIM] f32
# ----------------------------------------------------------------------------
def _fused_vae_kernel(x_ref, eps_ref,
                      w1_ref, b1_ref, w2_ref, b2_ref,
                      w3_ref, b3_ref, w4_ref, b4_ref,
                      h_ref, recon_ref):
    f32 = jnp.float32
    bf16 = jnp.bfloat16

    # encoder: Linear -> ReLU -> Linear   (bf16 MXU operands, f32 accumulate)
    x = x_ref[...].astype(bf16)
    h1 = jnp.dot(x, w1_ref[...], preferred_element_type=f32) + b1_ref[...]
    h1 = jnp.maximum(h1, 0.0)
    h2 = jnp.dot(h1.astype(bf16), w2_ref[...], preferred_element_type=f32) + b2_ref[...]
    h_ref[...] = h2                                   # mu || logvar (f32)

    # reparameterise: z = mu + eps * exp(logvar / 2)   (f32 VPU/EUP math)
    mu = h2[:, :LATENT_DIM]
    logvar = h2[:, LATENT_DIM:]
    z = mu + eps_ref[...] * jnp.exp(logvar * 0.5)

    # decoder: Linear -> ReLU -> Linear -> Sigmoid
    d1 = jnp.dot(z.astype(bf16), w3_ref[...], preferred_element_type=f32) + b3_ref[...]
    d1 = jnp.maximum(d1, 0.0)
    d2 = jnp.dot(d1.astype(bf16), w4_ref[...], preferred_element_type=f32) + b4_ref[...]
    recon_ref[...] = jax.nn.sigmoid(d2)


def _full_spec(shape):
    # Full-array block, single (grid-less) invocation.
    return pl.BlockSpec(shape, lambda: (0,) * len(shape))


def fused_vae_call(x_p, eps_p, w1, b1, w2, b2, w3, b3, w4, b4):
    mp = x_p.shape[0]
    inputs = (x_p, eps_p, w1, b1, w2, b2, w3, b3, w4, b4)
    return pl.pallas_call(
        _fused_vae_kernel,
        out_shape=(
            jax.ShapeDtypeStruct((mp, 2 * LATENT_DIM), jnp.float32),
            jax.ShapeDtypeStruct((mp, INPUT_DIM), jnp.float32),
        ),
        in_specs=[_full_spec(a.shape) for a in inputs],
        out_specs=(
            _full_spec((mp, 2 * LATENT_DIM)),
            _full_spec((mp, INPUT_DIM)),
        ),
        compiler_params=pltpu.CompilerParams(
            vmem_limit_bytes=32 * 1024 * 1024,
        ),
    )(*inputs)


# ----------------------------------------------------------------------------
# Parameter initialization (deterministic, PyTorch-Linear-like uniform init).
# Weights are stored as [in_features, out_features] (already transposed) and
# cast to bf16; biases stay f32 and are kept as [1, N] rows for broadcasting.
# ----------------------------------------------------------------------------
def init_linear_params(key, in_features, out_features):
    kw, kb = jax.random.split(key)
    bound = 1.0 / jnp.sqrt(jnp.float32(in_features))
    w = jax.random.uniform(
        kw, (in_features, out_features), jnp.float32, -bound, bound
    ).astype(jnp.bfloat16)
    b = jax.random.uniform(
        kb, (1, out_features), jnp.float32, -bound, bound
    )
    return w, b


def init_vae_params(key):
    keys = jax.random.split(key, 4)
    return {
        "enc1": init_linear_params(keys[0], INPUT_DIM, INTER_DIM),
        "enc2": init_linear_params(keys[1], INTER_DIM, LATENT_DIM * 2),
        "dec1": init_linear_params(keys[2], LATENT_DIM, INTER_DIM),
        "dec2": init_linear_params(keys[3], INTER_DIM, INPUT_DIM),
    }


# ----------------------------------------------------------------------------
# VAE forward, mirroring the PyTorch module.
# ----------------------------------------------------------------------------
def vae_forward(params, x, eps):
    org_shape = x.shape
    batch = org_shape[0]
    x_flat = x.reshape(batch, -1)

    # Pad batch to the 8-row sublane tile so the single MXU pass is dense.
    mp = max(SUBLANE, ((batch + SUBLANE - 1) // SUBLANE) * SUBLANE)
    x_p = jnp.pad(x_flat, ((0, mp - batch), (0, 0)))
    eps_p = jnp.pad(eps, ((0, mp - batch), (0, 0)))

    h, recon = fused_vae_call(
        x_p, eps_p,
        *params["enc1"], *params["enc2"],
        *params["dec1"], *params["dec2"],
    )

    mu = h[:batch, :LATENT_DIM]
    logvar = h[:batch, LATENT_DIM:]
    recon_x = recon[:batch].reshape(org_shape)
    return recon_x, mu, logvar


# ----------------------------------------------------------------------------
# Pure-JAX reference (same bf16 weights upcast to f32) for a sanity check.
# ----------------------------------------------------------------------------
def vae_reference(params, x, eps):
    org_shape = x.shape
    batch = org_shape[0]
    xf = x.reshape(batch, -1)

    def lin(v, w, b):
        return v @ w.astype(jnp.float32) + b

    h = jnp.maximum(lin(xf, *params["enc1"]), 0.0)
    h = lin(h, *params["enc2"])
    mu, logvar = h[:, :LATENT_DIM], h[:, LATENT_DIM:]
    z = mu + eps * jnp.exp(logvar * 0.5)
    d = jnp.maximum(lin(z, *params["dec1"]), 0.0)
    recon = jax.nn.sigmoid(lin(d, *params["dec2"]))
    return recon.reshape(org_shape), mu, logvar


if __name__ == "__main__":
    key = jax.random.PRNGKey(0)
    k_params, k_x, k_eps = jax.random.split(key, 3)

    params = init_vae_params(k_params)
    x = jax.random.uniform(k_x, (B, C, H, W), jnp.float32)        # NCHW input
    eps = jax.random.normal(k_eps, (B, LATENT_DIM), jnp.float32)  # torch.randn_like(mu)

    recon_x, mu, logvar = jax.jit(vae_forward)(params, x, eps)
    jax.block_until_ready((recon_x, mu, logvar))

    assert recon_x.shape == (B, C, H, W)
    assert mu.shape == (B, LATENT_DIM)
    assert logvar.shape == (B, LATENT_DIM)
    assert bool(jnp.all(jnp.isfinite(recon_x)))

    # Loose sanity check vs. f32 reference (kernel casts activations to bf16
    # for the MXU, so allow a small tolerance).
    r_ref, mu_ref, lv_ref = vae_reference(params, x, eps)
    assert float(jnp.max(jnp.abs(recon_x - r_ref))) < 5e-2
    assert float(jnp.max(jnp.abs(mu - mu_ref))) < 5e-2
    assert float(jnp.max(jnp.abs(logvar - lv_ref))) < 5e-2

    print("KERNEL_OK")
</pallas_src>

<mosaic_0001>
module attributes {stable_mosaic.version = 11 : i64} {
  func.func @_fused_vae_kernel(%arg0: memref<8x768xf32, #tpu.memory_space<vmem>>, %arg1: memref<8x64xf32, #tpu.memory_space<vmem>>, %arg2: memref<768x256xbf16, #tpu.memory_space<vmem>>, %arg3: memref<1x256xf32, #tpu.memory_space<vmem>>, %arg4: memref<256x128xbf16, #tpu.memory_space<vmem>>, %arg5: memref<1x128xf32, #tpu.memory_space<vmem>>, %arg6: memref<64x256xbf16, #tpu.memory_space<vmem>>, %arg7: memref<1x256xf32, #tpu.memory_space<vmem>>, %arg8: memref<256x768xbf16, #tpu.memory_space<vmem>>, %arg9: memref<1x768xf32, #tpu.memory_space<vmem>>, %arg10: memref<8x128xf32, #tpu.memory_space<vmem>>, %arg11: memref<8x768xf32, #tpu.memory_space<vmem>>) attributes {dimension_semantics = [], scalar_prefetch = 0 : i64, scratch_operands = 0 : i64, tpu.core_type = #tpu.core_type<tc>} {
    %c0 = arith.constant 0 : index
    %c0_0 = arith.constant 0 : index
    %0 = vector.load %arg0[%c0, %c0_0] : memref<8x768xf32, #tpu.memory_space<vmem>>, vector<8x768xf32>
    %1 = arith.truncf %0 : vector<8x768xf32> to vector<8x768xbf16>
    %c0_1 = arith.constant 0 : index
    %c0_2 = arith.constant 0 : index
    %2 = vector.load %arg2[%c0_1, %c0_2] : memref<768x256xbf16, #tpu.memory_space<vmem>>, vector<768x256xbf16>
    %cst = arith.constant dense<0.000000e+00> : vector<8x256xf32>
    %3 = tpu.matmul %1, %2, %cst {dimension_numbers = #tpu.dot_dimension_numbers<[1], [0], [0], [1], [0, 0, 1, 1], [], []>} : vector<8x768xbf16>, vector<768x256xbf16>, vector<8x256xf32> -> vector<8x256xf32>
    %c0_3 = arith.constant 0 : index
    %c0_4 = arith.constant 0 : index
    %4 = vector.load %arg3[%c0_3, %c0_4] : memref<1x256xf32, #tpu.memory_space<vmem>>, vector<1x256xf32>
    %5 = vector.broadcast %4 : vector<1x256xf32> to vector<8x256xf32>
    %6 = arith.addf %3, %5 : vector<8x256xf32>
    %cst_5 = arith.constant 0.000000e+00 : f32
    %7 = vector.broadcast %cst_5 : f32 to vector<8x256xf32>
    %8 = arith.maximumf %6, %7 : vector<8x256xf32>
    %9 = arith.truncf %8 : vector<8x256xf32> to vector<8x256xbf16>
    %c0_6 = arith.constant 0 : index
    %c0_7 = arith.constant 0 : index
    %10 = vector.load %arg4[%c0_6, %c0_7] : memref<256x128xbf16, #tpu.memory_space<vmem>>, vector<256x128xbf16>
    %cst_8 = arith.constant dense<0.000000e+00> : vector<8x128xf32>
    %11 = tpu.matmul %9, %10, %cst_8 {dimension_numbers = #tpu.dot_dimension_numbers<[1], [0], [0], [1], [0, 0, 1, 1], [], []>} : vector<8x256xbf16>, vector<256x128xbf16>, vector<8x128xf32> -> vector<8x128xf32>
    %c0_9 = arith.constant 0 : index
    %c0_10 = arith.constant 0 : index
    %12 = vector.load %arg5[%c0_9, %c0_10] : memref<1x128xf32, #tpu.memory_space<vmem>>, vector<1x128xf32>
    %13 = vector.broadcast %12 : vector<1x128xf32> to vector<8x128xf32>
    %14 = arith.addf %11, %13 : vector<8x128xf32>
    %c0_11 = arith.constant 0 : index
    %c0_12 = arith.constant 0 : index
    %15 = vector.load %arg10[%c0_11, %c0_12] : memref<8x128xf32, #tpu.memory_space<vmem>>, vector<8x128xf32>
    tpu.vector_store %arg10[%c0_11, %c0_12], %14 {strides = array<i32>} : memref<8x128xf32, #tpu.memory_space<vmem>>, vector<8x128xf32>,
    %16 = vector.extract_strided_slice %14 {offsets = [0, 0], sizes = [8, 64], strides = [1, 1]} : vector<8x128xf32> to vector<8x64xf32>
    %17 = vector.extract_strided_slice %14 {offsets = [0, 64], sizes = [8, 64], strides = [1, 1]} : vector<8x128xf32> to vector<8x64xf32>
    %c0_13 = arith.constant 0 : index
    %c0_14 = arith.constant 0 : index
    %18 = vector.load %arg1[%c0_13, %c0_14] : memref<8x64xf32, #tpu.memory_space<vmem>>, vector<8x64xf32>
    %cst_15 = arith.constant 5.000000e-01 : f32
    %19 = vector.broadcast %cst_15 : f32 to vector<8x64xf32>
    %20 = arith.mulf %17, %19 : vector<8x64xf32>
    %21 = math.exp %20 : vector<8x64xf32>
    %22 = arith.mulf %18, %21 : vector<8x64xf32>
    %23 = arith.addf %16, %22 : vector<8x64xf32>
    %24 = arith.truncf %23 : vector<8x64xf32> to vector<8x64xbf16>
    %c0_16 = arith.constant 0 : index
    %c0_17 = arith.constant 0 : index
    %25 = vector.load %arg6[%c0_16, %c0_17] : memref<64x256xbf16, #tpu.memory_space<vmem>>, vector<64x256xbf16>
    %cst_18 = arith.constant dense<0.000000e+00> : vector<8x256xf32>
    %26 = tpu.matmul %24, %25, %cst_18 {dimension_numbers = #tpu.dot_dimension_numbers<[1], [0], [0], [1], [0, 0, 1, 1], [], []>} : vector<8x64xbf16>, vector<64x256xbf16>, vector<8x256xf32> -> vector<8x256xf32>
    %c0_19 = arith.constant 0 : index
    %c0_20 = arith.constant 0 : index
    %27 = vector.load %arg7[%c0_19, %c0_20] : memref<1x256xf32, #tpu.memory_space<vmem>>, vector<1x256xf32>
    %28 = vector.broadcast %27 : vector<1x256xf32> to vector<8x256xf32>
    %29 = arith.addf %26, %28 : vector<8x256xf32>
    %cst_21 = arith.constant 0.000000e+00 : f32
    %30 = vector.broadcast %cst_21 : f32 to vector<8x256xf32>
    %31 = arith.maximumf %29, %30 : vector<8x256xf32>
    %32 = arith.truncf %31 : vector<8x256xf32> to vector<8x256xbf16>
    %c0_22 = arith.constant 0 : index
    %c0_23 = arith.constant 0 : index
    %33 = vector.load %arg8[%c0_22, %c0_23] : memref<256x768xbf16, #tpu.memory_space<vmem>>, vector<256x768xbf16>
    %cst_24 = arith.constant dense<0.000000e+00> : vector<8x768xf32>
    %34 = tpu.matmul %32, %33, %cst_24 {dimension_numbers = #tpu.dot_dimension_numbers<[1], [0], [0], [1], [0, 0, 1, 1], [], []>} : vector<8x256xbf16>, vector<256x768xbf16>, vector<8x768xf32> -> vector<8x768xf32>
    %c0_25 = arith.constant 0 : index
    %c0_26 = arith.constant 0 : index
    %35 = vector.load %arg9[%c0_25, %c0_26] : memref<1x768xf32, #tpu.memory_space<vmem>>, vector<1x768xf32>
    %36 = vector.broadcast %35 : vector<1x768xf32> to vector<8x768xf32>
    %37 = arith.addf %34, %36 : vector<8x768xf32>
    %38 = arith.negf %37 : vector<8x768xf32>
    %39 = math.exp %38 : vector<8x768xf32>
    %cst_27 = arith.constant 1.000000e+00 : f32
    %40 = vector.broadcast %cst_27 : f32 to vector<8x768xf32>
    %41 = arith.addf %40, %39 : vector<8x768xf32>
    %42 = arith.divf %40, %41 : vector<8x768xf32>
    %c0_28 = arith.constant 0 : index
    %c0_29 = arith.constant 0 : index
    %43 = vector.load %arg11[%c0_28, %c0_29] : memref<8x768xf32, #tpu.memory_space<vmem>>, vector<8x768xf32>
    tpu.vector_store %arg11[%c0_28, %c0_29], %42 {strides = array<i32>} : memref<8x768xf32, #tpu.memory_space<vmem>>, vector<8x768xf32>,
    return
  }
}

</mosaic_0001>

<llo_original>
// kernel: vae_forward.1
$region0: #{vae_forward.1}
  #allocation0 [shape = 'u32[]', space=smem, size = 0x4, offset = 0x4, fixed_abs, tag = 'smem constant byte address 0x4 - core index']
  #allocation1 [shape = 'u32[144,128]{1,0:T(1,128)}', space=vmem, size = 0x12000, scoped, tag = 'internal scratch']
  %s0 = inlined_call_operand.vmem [shape: f32[8,768], index: 0, kind: input, shape index: {}]
  %s1 = inlined_call_operand.vmem [shape: f32[8,64], index: 1, kind: input, shape index: {}]
  %s2 = inlined_call_operand.hbm [shape: bf16[768,256], index: 2, kind: input, shape index: {}]
  %s3 = inlined_call_operand.vmem [shape: f32[1,256], index: 3, kind: input, shape index: {}]
  %s4 = inlined_call_operand.vmem [shape: bf16[256,128], index: 4, kind: input, shape index: {}]
  %s5 = inlined_call_operand.vmem [shape: f32[1,128], index: 5, kind: input, shape index: {}]
  %s6 = inlined_call_operand.hbm [shape: bf16[64,256], index: 6, kind: input, shape index: {}]
  %s7 = inlined_call_operand.vmem [shape: f32[1,256], index: 7, kind: input, shape index: {}]
  %s8 = inlined_call_operand.hbm [shape: bf16[256,768], index: 8, kind: input, shape index: {}]
  %s9 = inlined_call_operand.vmem [shape: f32[1,768], index: 9, kind: input, shape index: {}]
  %s10 = inlined_call_operand.vmem [shape: f32[8,128], index: 10, kind: output, shape index: {0}]
  %s11 = inlined_call_operand.vmem [shape: f32[8,768], index: 11, kind: output, shape index: {1}]
  %12 = xla_tuple %s10, %s11
  %s13 = sld [smem:[#allocation0]]
  $region70: #{vae_forward.1} parent=0
    _
  %s15 = ssub.s32 1, %s13
  %s16 = scalar_select 0, %s15, %s13
  $region1: #{vae_forward.1} parent=0
    #allocation2 [shape = 'u8[393216]{0}', space=vmem, size = 0x60000, scoped, tag = 'input window, operand 2, single buffered']
    #allocation3 [shape = 's32[1]{0}', space=sflag, size = 0x4, scoped, tag = 'scoped memory for vae_forward.1']
    #allocation4 [shape = 'u8[32768]{0}', space=vmem, size = 0x8000, scoped, tag = 'input window, operand 6, single buffered']
    #allocation5 [shape = 's32[1]{0}', space=sflag, size = 0x4, scoped, tag = 'scoped memory for vae_forward.1']
    #allocation6 [shape = 'u8[393216]{0}', space=vmem, size = 0x60000, scoped, tag = 'input window, operand 8, single buffered']
    %17 = vsyncpa [#allocation3], 0
    %18 = vsyncpa [#allocation5], 0
    // Predicated region
    $region2: #{vae_forward.1} parent=1 // pred_check
      _
    $region3: #{vae_forward.1} parent=1 // pred_check_branch
      %20 = sbr.rel (0) target = $region5
    $region4: #{vae_forward.1} parent=1 // pred_region
      _
    $region5: #{vae_forward.1} parent=1 // pred_fallthru
      _
    // Predicated region
    $region6: #{vae_forward.1} parent=1 // pred_check
      _
    $region7: #{vae_forward.1} parent=1 // pred_check_branch
      %22 = sbr.rel (0) target = $region9
    $region8: #{vae_forward.1} parent=1 // pred_region
      _
    $region9: #{vae_forward.1} parent=1 // pred_fallthru
      _
    // Predicated region
    $region10: #{vae_forward.1} parent=1 // pred_check
      _
    $region11: #{vae_forward.1} parent=1 // pred_check_branch
      %24 = sbr.rel (0) target = $region13
    $region12: #{vae_forward.1} parent=1 // pred_region
      %s26 = ssub.s32 12288, 12288
      %27 = vsyncadd [#allocation3], %s26
      %s28 = sshll.u32 [#allocation2], 4
      %s29 = int_to_ptr.vmem [resolvable:$true] %s28
      %34 = dma.hbm_to_vmem [thread:$0]  %s2, 12288, %s29, [#allocation3], 128, 128, 8
    $region13: #{vae_forward.1} parent=1 // pred_fallthru
      _
    // Predicated region
    $region14: #{vae_forward.1} parent=1 // pred_check
      _
    $region15: #{vae_forward.1} parent=1 // pred_check_branch
      %36 = sbr.rel (0) target = $region17
    $region16: #{vae_forward.1} parent=1 // pred_region
      _
    $region17: #{vae_forward.1} parent=1 // pred_fallthru
      _
    // Predicated region
    $region18: #{vae_forward.1} parent=1 // pred_check
      _
    $region19: #{vae_forward.1} parent=1 // pred_check_branch
      %38 = sbr.rel (0) target = $region21
    $region20: #{vae_forward.1} parent=1 // pred_region
      _
    $region21: #{vae_forward.1} parent=1 // pred_fallthru
      _
    // Predicated region
    $region22: #{vae_forward.1} parent=1 // pred_check
      _
    $region23: #{vae_forward.1} parent=1 // pred_check_branch
      %40 = sbr.rel (0) target = $region25
    $region24: #{vae_forward.1} parent=1 // pred_region
      _
    $region25: #{vae_forward.1} parent=1 // pred_fallthru
      _
    // Predicated region
    $region26: #{vae_forward.1} parent=1 // pred_check
      _
    $region27: #{vae_forward.1} parent=1 // pred_check_branch
      %42 = sbr.rel (0) target = $region29
    $region28: #{vae_forward.1} parent=1 // pred_region
      %s44 = ssub.s32 1024, 1024
      %45 = vsyncadd [#allocation5], %s44
      %s46 = sshll.u32 [#allocation4], 4
      %s47 = int_to_ptr.vmem [resolvable:$true] %s46
      %52 = dma.hbm_to_vmem [thread:$0]  %s6, 1024, %s47, [#allocation5], 128, 128, 8
    $region29: #{vae_forward.1} parent=1 // pred_fallthru
      _
    // Predicated region
    $region30: #{vae_forward.1} parent=1 // pred_check
      _
    $region31: #{vae_forward.1} parent=1 // pred_check_branch
      %54 = sbr.rel (0) target = $region33
    $region32: #{vae_forward.1} parent=1 // pred_region
      _
    $region33: #{vae_forward.1} parent=1 // pred_fallthru
      _
    // Predicated region
    $region34: #{vae_forward.1} parent=1 // pred_check
      _
    $region35: #{vae_forward.1} parent=1 // pred_check_branch
      %56 = sbr.rel (0) target = $region37
    $region36: #{vae_forward.1} parent=1 // pred_region
      %s58 = ssub.s32 12288, 12288
      %59 = vsyncadd [#allocation5], %s58
      %s60 = sshll.u32 [#allocation6], 4
      %s61 = int_to_ptr.vmem [resolvable:$true] %s60
      %66 = dma.hbm_to_vmem [thread:$0]  %s8, 12288, %s61, [#allocation5], 384, 384, 24
    $region37: #{vae_forward.1} parent=1 // pred_fallthru
      _
    // Predicated region
    $region38: #{vae_forward.1} parent=1 // pred_check
      _
    $region39: #{vae_forward.1} parent=1 // pred_check_branch
      %68 = sbr.rel (0) target = $region41
    $region40: #{vae_forward.1} parent=1 // pred_region
      _
    $region41: #{vae_forward.1} parent=1 // pred_fallthru
      _
    // Predicated region
    $region42: #{vae_forward.1} parent=1 // pred_check
      _
    $region43: #{vae_forward.1} parent=1 // pred_check_branch
      %70 = sbr.rel (0) target = $region45
    $region44: #{vae_forward.1} parent=1 // pred_region
      %71 = dma.done [#allocation3], 12288
    $region45: #{vae_forward.1} parent=1 // pred_fallthru
      _
    // Predicated region
    $region46: #{vae_forward.1} parent=1 // pred_check
      _
    $region47: #{vae_forward.1} parent=1 // pred_check_branch
      %73 = sbr.rel (0) target = $region49
    $region48: #{vae_forward.1} parent=1 // pred_region
      %74 = dma.done [#allocation5], 1024
    $region49: #{vae_forward.1} parent=1 // pred_fallthru
      _
    // Predicated region
    $region50: #{vae_forward.1} parent=1 // pred_check
      _
    $region51: #{vae_forward.1} parent=1 // pred_check_branch
      %76 = sbr.rel (0) target = $region53
    $region52: #{vae_forward.1} parent=1 // pred_region
      %77 = dma.done [#allocation5], 12288
    $region53: #{vae_forward.1} parent=1 // pred_fallthru
      _
    %v79 = vld [vmem:[%s0] sm:$0xff]
    %v80 = vld [vmem:[%s0 + $0x8] sm:$0xff]
    %v81 = vld [vmem:[%s0 + $0x10] sm:$0xff]
    %v82 = vld [vmem:[%s0 + $0x18] sm:$0xff]
    %v83 = vld [vmem:[%s0 + $0x20] sm:$0xff]
    %v84 = vld [vmem:[%s0 + $0x28] sm:$0xff]
    %v85 = vpack.c.bf16 %v79, %v79
    %v86 = vpack.c.bf16 %v80, %v80
    %v87 = vpack.c.bf16 %v81, %v81
    %v88 = vpack.c.bf16 %v82, %v82
    %v89 = vpack.c.bf16 %v83, %v83
    %v90 = vpack.c.bf16 %v84, %v84
    %v91 = vld [vmem:[#allocation2] sm:$0xff]
    %v92 = vld [vmem:[#allocation2 + $0x8] sm:$0xff]
    %v93 = vld [vmem:[#allocation2 + $0x10] sm:$0xff]
    %v94 = vld [vmem:[#allocation2 + $0x18] sm:$0xff]
    %v95 = vld [vmem:[#allocation2 + $0x20] sm:$0xff]
    %v96 = vld [vmem:[#allocation2 + $0x28] sm:$0xff]
    %v97 = vld [vmem:[#allocation2 + $0x30] sm:$0xff]
    %v98 = vld [vmem:[#allocation2 + $0x38] sm:$0xff]
    %v99 = vld [vmem:[#allocation2 + $0x40] sm:$0xff]
    %v100 = vld [vmem:[#allocation2 + $0x48] sm:$0xff]
    %v101 = vld [vmem:[#allocation2 + $0x50] sm:$0xff]
    %v102 = vld [vmem:[#allocation2 + $0x58] sm:$0xff]
    %v103 = vld [vmem:[#allocation2 + $0x60] sm:$0xff]
    %v104 = vld [vmem:[#allocation2 + $0x68] sm:$0xff]
    %v105 = vld [vmem:[#allocation2 + $0x70] sm:$0xff]
    %v106 = vld [vmem:[#allocation2 + $0x78] sm:$0xff]
    %v107 = vld [vmem:[#allocation2 + $0x80] sm:$0xff]
    %v108 = vld [vmem:[#allocation2 + $0x88] sm:$0xff]
    %v109 = vld [vmem:[#allocation2 + $0x90] sm:$0xff]
    %v110 = vld [vmem:[#allocation2 + $0x98] sm:$0xff]
    %v111 = vld [vmem:[#allocation2 + $0xa0] sm:$0xff]
    %v112 = vld [vmem:[#allocation2 + $0xa8] sm:$0xff]
    %v113 = vld [vmem:[#allocation2 + $0xb0] sm:$0xff]
    %v114 = vld [vmem:[#allocation2 + $0xb8] sm:$0xff]
    %v115 = vld [vmem:[#allocation2 + $0xc0] sm:$0xff]
    %v116 = vld [vmem:[#allocation2 + $0xc8] sm:$0xff]
    %v117 = vld [vmem:[#allocation2 + $0xd0] sm:$0xff]
    %v118 = vld [vmem:[#allocation2 + $0xd8] sm:$0xff]
    %v119 = vld [vmem:[#allocation2 + $0xe0] sm:$0xff]
    %v120 = vld [vmem:[#allocation2 + $0xe8] sm:$0xff]
    %v121 = vld [vmem:[#allocation2 + $0xf0] sm:$0xff]
    %v122 = vld [vmem:[#allocation2 + $0xf8] sm:$0xff]
    %v123 = vld [vmem:[#allocation2 + $0x100] sm:$0xff]
    %v124 = vld [vmem:[#allocation2 + $0x108] sm:$0xff]
    %v125 = vld [vmem:[#allocation2 + $0x110] sm:$0xff]
    %v126 = vld [vmem:[#allocation2 + $0x118] sm:$0xff]
    %v127 = vld [vmem:[#allocation2 + $0x120] sm:$0xff]
    %v128 = vld [vmem:[#allocation2 + $0x128] sm:$0xff]
    %v129 = vld [vmem:[#allocation2 + $0x130] sm:$0xff]
    %v130 = vld [vmem:[#allocation2 + $0x138] sm:$0xff]
    %v131 = vld [vmem:[#allocation2 + $0x140] sm:$0xff]
    %v132 = vld [vmem:[#allocation2 + $0x148] sm:$0xff]
    %v133 = vld [vmem:[#allocation2 + $0x150] sm:$0xff]
    %v134 = vld [vmem:[#allocation2 + $0x158] sm:$0xff]
    %v135 = vld [vmem:[#allocation2 + $0x160] sm:$0xff]
    %v136 = vld [vmem:[#allocation2 + $0x168] sm:$0xff]
    %v137 = vld [vmem:[#allocation2 + $0x170] sm:$0xff]
    %v138 = vld [vmem:[#allocation2 + $0x178] sm:$0xff]
    %v139 = vld [vmem:[#allocation2 + $0x180] sm:$0xff]
    %v140 = vld [vmem:[#allocation2 + $0x188] sm:$0xff]
    %v141 = vld [vmem:[#allocation2 + $0x190] sm:$0xff]
    %v142 = vld [vmem:[#allocation2 + $0x198] sm:$0xff]
    %v143 = vld [vmem:[#allocation2 + $0x1a0] sm:$0xff]
    %v144 = vld [vmem:[#allocation2 + $0x1a8] sm:$0xff]
    %v145 = vld [vmem:[#allocation2 + $0x1b0] sm:$0xff]
    %v146 = vld [vmem:[#allocation2 + $0x1b8] sm:$0xff]
    %v147 = vld [vmem:[#allocation2 + $0x1c0] sm:$0xff]
    %v148 = vld [vmem:[#allocation2 + $0x1c8] sm:$0xff]
    %v149 = vld [vmem:[#allocation2 + $0x1d0] sm:$0xff]
    %v150 = vld [vmem:[#allocation2 + $0x1d8] sm:$0xff]
    %v151 = vld [vmem:[#allocation2 + $0x1e0] sm:$0xff]
    %v152 = vld [vmem:[#allocation2 + $0x1e8] sm:$0xff]
    %v153 = vld [vmem:[#allocation2 + $0x1f0] sm:$0xff]
    %v154 = vld [vmem:[#allocation2 + $0x1f8] sm:$0xff]
    %v155 = vld [vmem:[#allocation2 + $0x200] sm:$0xff]
    %v156 = vld [vmem:[#allocation2 + $0x208] sm:$0xff]
    %v157 = vld [vmem:[#allocation2 + $0x210] sm:$0xff]
    %v158 = vld [vmem:[#allocation2 + $0x218] sm:$0xff]
    %v159 = vld [vmem:[#allocation2 + $0x220] sm:$0xff]
    %v160 = vld [vmem:[#allocation2 + $0x228] sm:$0xff]
    %v161 = vld [vmem:[#allocation2 + $0x230] sm:$0xff]
    %v162 = vld [vmem:[#allocation2 + $0x238] sm:$0xff]
    %v163 = vld [vmem:[#allocation2 + $0x240] sm:$0xff]
    %v164 = vld [vmem:[#allocation2 + $0x248] sm:$0xff]
    %v165 = vld [vmem:[#allocation2 + $0x250] sm:$0xff]
    %v166 = vld [vmem:[#allocation2 + $0x258] sm:$0xff]
    %v167 = vld [vmem:[#allocation2 + $0x260] sm:$0xff]
    %v168 = vld [vmem:[#allocation2 + $0x268] sm:$0xff]
    %v169 = vld [vmem:[#allocation2 + $0x270] sm:$0xff]
    %v170 = vld [vmem:[#allocation2 + $0x278] sm:$0xff]
    %v171 = vld [vmem:[#allocation2 + $0x280] sm:$0xff]
    %v172 = vld [vmem:[#allocation2 + $0x288] sm:$0xff]
    %v173 = vld [vmem:[#allocation2 + $0x290] sm:$0xff]
    %v174 = vld [vmem:[#allocation2 + $0x298] sm:$0xff]
    %v175 = vld [vmem:[#allocation2 + $0x2a0] sm:$0xff]
    %v176 = vld [vmem:[#allocation2 + $0x2a8] sm:$0xff]
    %v177 = vld [vmem:[#allocation2 + $0x2b0] sm:$0xff]
    %v178 = vld [vmem:[#allocation2 + $0x2b8] sm:$0xff]
    %v179 = vld [vmem:[#allocation2 + $0x2c0] sm:$0xff]
    %v180 = vld [vmem:[#allocation2 + $0x2c8] sm:$0xff]
    %v181 = vld [vmem:[#allocation2 + $0x2d0] sm:$0xff]
    %v182 = vld [vmem:[#allocation2 + $0x2d8] sm:$0xff]
    %v183 = vld [vmem:[#allocation2 + $0x2e0] sm:$0xff]
    %v184 = vld [vmem:[#allocation2 + $0x2e8] sm:$0xff]
    %v185 = vld [vmem:[#allocation2 + $0x2f0] sm:$0xff]
    %v186 = vld [vmem:[#allocation2 + $0x2f8] sm:$0xff]
    %v187 = vld [vmem:[%s3] sm:$0x3]
    %v189 = vlaneseq
    %v190 = vshrl.u32 %v189, 7
    %v191 = vsub.s32 0, %v190
    %v192 = vrot.slane %v187, %v191
    %v193 = vlaneseq
    %v194 = vshrl.u32 %v193, 7
    %v195 = vsub.s32 1, %v194
    %v196 = vrot.slane %v187, %v195
    %v295 = vunpack.c.l.b16 %v91
    %v296 = vunpack.c.h.b16 %v91
    %v297 = vunpack.c.l.b16 %v92
    %v298 = vunpack.c.h.b16 %v92
    %v299 = vunpack.c.l.b16 %v93
    %v300 = vunpack.c.h.b16 %v93
    %v301 = vunpack.c.l.b16 %v94
    %v302 = vunpack.c.h.b16 %v94
    %v303 = vunpack.c.l.b16 %v95
    %v304 = vunpack.c.h.b16 %v95
    %v305 = vunpack.c.l.b16 %v96
    %v306 = vunpack.c.h.b16 %v96
    %v307 = vunpack.c.l.b16 %v97
    %v308 = vunpack.c.h.b16 %v97
    %v309 = vunpack.c.l.b16 %v98
    %v310 = vunpack.c.h.b16 %v98
    %v311 = vunpack.c.l.b16 %v99
    %v312 = vunpack.c.h.b16 %v99
    %v313 = vunpack.c.l.b16 %v100
    %v314 = vunpack.c.h.b16 %v100
    %v315 = vunpack.c.l.b16 %v101
    %v316 = vunpack.c.h.b16 %v101
    %v317 = vunpack.c.l.b16 %v102
    %v318 = vunpack.c.h.b16 %v102
    %v319 = vunpack.c.l.b16 %v103
    %v320 = vunpack.c.h.b16 %v103
    %v321 = vunpack.c.l.b16 %v104
    %v322 = vunpack.c.h.b16 %v104
    %v323 = vunpack.c.l.b16 %v105
    %v324 = vunpack.c.h.b16 %v105
    %v325 = vunpack.c.l.b16 %v106
    %v326 = vunpack.c.h.b16 %v106
    %v327 = vunpack.c.l.b16 %v107
    %v328 = vunpack.c.h.b16 %v107
    %v329 = vunpack.c.l.b16 %v108
    %v330 = vunpack.c.h.b16 %v108
    %v331 = vunpack.c.l.b16 %v109
    %v332 = vunpack.c.h.b16 %v109
    %v333 = vunpack.c.l.b16 %v110
    %v334 = vunpack.c.h.b16 %v110
    %v335 = vunpack.c.l.b16 %v111
    %v336 = vunpack.c.h.b16 %v111
    %v337 = vunpack.c.l.b16 %v112
    %v338 = vunpack.c.h.b16 %v112
    %v339 = vunpack.c.l.b16 %v113
    %v340 = vunpack.c.h.b16 %v113
    %v341 = vunpack.c.l.b16 %v114
    %v342 = vunpack.c.h.b16 %v114
    %v343 = vunpack.c.l.b16 %v115
    %v344 = vunpack.c.h.b16 %v115
    %v345 = vunpack.c.l.b16 %v116
    %v346 = vunpack.c.h.b16 %v116
    %v347 = vunpack.c.l.b16 %v117
    %v348 = vunpack.c.h.b16 %v117
    %v349 = vunpack.c.l.b16 %v118
    %v350 = vunpack.c.h.b16 %v118
    %v351 = vunpack.c.l.b16 %v119
    %v352 = vunpack.c.h.b16 %v119
    %v353 = vunpack.c.l.b16 %v120
    %v354 = vunpack.c.h.b16 %v120
    %v355 = vunpack.c.l.b16 %v121
    %v356 = vunpack.c.h.b16 %v121
    %v357 = vunpack.c.l.b16 %v122
    %v358 = vunpack.c.h.b16 %v122
    %v359 = vunpack.c.l.b16 %v123
    %v360 = vunpack.c.h.b16 %v123
    %v361 = vunpack.c.l.b16 %v124
    %v362 = vunpack.c.h.b16 %v124
    %v363 = vunpack.c.l.b16 %v125
    %v364 = vunpack.c.h.b16 %v125
    %v365 = vunpack.c.l.b16 %v126
    %v366 = vunpack.c.h.b16 %v126
    %v367 = vunpack.c.l.b16 %v127
    %v368 = vunpack.c.h.b16 %v127
    %v369 = vunpack.c.l.b16 %v128
    %v370 = vunpack.c.h.b16 %v128
    %v371 = vunpack.c.l.b16 %v129
    %v372 = vunpack.c.h.b16 %v129
    %v373 = vunpack.c.l.b16 %v130
    %v374 = vunpack.c.h.b16 %v130
    %v375 = vunpack.c.l.b16 %v131
    %v376 = vunpack.c.h.b16 %v131
    %v377 = vunpack.c.l.b16 %v132
    %v378 = vunpack.c.h.b16 %v132
    %v379 = vunpack.c.l.b16 %v133
    %v380 = vunpack.c.h.b16 %v133
    %v381 = vunpack.c.l.b16 %v134
    %v382 = vunpack.c.h.b16 %v134
    %v383 = vunpack.c.l.b16 %v135
    %v384 = vunpack.c.h.b16 %v135
    %v385 = vunpack.c.l.b16 %v136
    %v386 = vunpack.c.h.b16 %v136
    %v387 = vunpack.c.l.b16 %v137
    %v388 = vunpack.c.h.b16 %v137
    %v389 = vunpack.c.l.b16 %v138
    %v390 = vunpack.c.h.b16 %v138
    %v391 = vunpack.c.l.b16 %v139
    %v392 = vunpack.c.h.b16 %v139
    %v393 = vunpack.c.l.b16 %v140
    %v394 = vunpack.c.h.b16 %v140
    %v395 = vunpack.c.l.b16 %v141
    %v396 = vunpack.c.h.b16 %v141
    %v397 = vunpack.c.l.b16 %v142
    %v398 = vunpack.c.h.b16 %v142
    %v399 = vunpack.c.l.b16 %v143
    %v400 = vunpack.c.h.b16 %v143
    %v401 = vunpack.c.l.b16 %v144
    %v402 = vunpack.c.h.b16 %v144
    %v403 = vunpack.c.l.b16 %v145
    %v404 = vunpack.c.h.b16 %v145
    %v405 = vunpack.c.l.b16 %v146
    %v406 = vunpack.c.h.b16 %v146
    %v407 = vunpack.c.l.b16 %v147
    %v408 = vunpack.c.h.b16 %v147
    %v409 = vunpack.c.l.b16 %v148
    %v410 = vunpack.c.h.b16 %v148
    %v411 = vunpack.c.l.b16 %v149
    %v412 = vunpack.c.h.b16 %v149
    %v413 = vunpack.c.l.b16 %v150
    %v414 = vunpack.c.h.b16 %v150
    %v415 = vunpack.c.l.b16 %v151
    %v416 = vunpack.c.h.b16 %v151
    %v417 = vunpack.c.l.b16 %v152
    %v418 = vunpack.c.h.b16 %v152
    %v419 = vunpack.c.l.b16 %v153
    %v420 = vunpack.c.h.b16 %v153
    %v421 = vunpack.c.l.b16 %v154
    %v422 = vunpack.c.h.b16 %v154
    %v423 = vunpack.c.l.b16 %v155
    %v424 = vunpack.c.h.b16 %v155
    %v425 = vunpack.c.l.b16 %v156
    %v426 = vunpack.c.h.b16 %v156
    %v427 = vunpack.c.l.b16 %v157
    %v428 = vunpack.c.h.b16 %v157
    %v429 = vunpack.c.l.b16 %v158
    %v430 = vunpack.c.h.b16 %v158
    %v431 = vunpack.c.l.b16 %v159
    %v432 = vunpack.c.h.b16 %v159
    %v433 = vunpack.c.l.b16 %v160
    %v434 = vunpack.c.h.b16 %v160
    %v435 = vunpack.c.l.b16 %v161
    %v436 = vunpack.c.h.b16 %v161
    %v437 = vunpack.c.l.b16 %v162
    %v438 = vunpack.c.h.b16 %v162
    %v439 = vunpack.c.l.b16 %v163
    %v440 = vunpack.c.h.b16 %v163
    %v441 = vunpack.c.l.b16 %v164
    %v442 = vunpack.c.h.b16 %v164
    %v443 = vunpack.c.l.b16 %v165
    %v444 = vunpack.c.h.b16 %v165
    %v445 = vunpack.c.l.b16 %v166
    %v446 = vunpack.c.h.b16 %v166
    %v447 = vunpack.c.l.b16 %v167
    %v448 = vunpack.c.h.b16 %v167
    %v449 = vunpack.c.l.b16 %v168
    %v450 = vunpack.c.h.b16 %v168
    %v451 = vunpack.c.l.b16 %v169
    %v452 = vunpack.c.h.b16 %v169
    %v453 = vunpack.c.l.b16 %v170
    %v454 = vunpack.c.h.b16 %v170
    %v455 = vunpack.c.l.b16 %v171
    %v456 = vunpack.c.h.b16 %v171
    %v457 = vunpack.c.l.b16 %v172
    %v458 = vunpack.c.h.b16 %v172
    %v459 = vunpack.c.l.b16 %v173
    %v460 = vunpack.c.h.b16 %v173
    %v461 = vunpack.c.l.b16 %v174
    %v462 = vunpack.c.h.b16 %v174
    %v463 = vunpack.c.l.b16 %v175
    %v464 = vunpack.c.h.b16 %v175
    %v465 = vunpack.c.l.b16 %v176
    %v466 = vunpack.c.h.b16 %v176
    %v467 = vunpack.c.l.b16 %v177
    %v468 = vunpack.c.h.b16 %v177
    %v469 = vunpack.c.l.b16 %v178
    %v470 = vunpack.c.h.b16 %v178
    %v471 = vunpack.c.l.b16 %v179
    %v472 = vunpack.c.h.b16 %v179
    %v473 = vunpack.c.l.b16 %v180
    %v474 = vunpack.c.h.b16 %v180
    %v475 = vunpack.c.l.b16 %v181
    %v476 = vunpack.c.h.b16 %v181
    %v477 = vunpack.c.l.b16 %v182
    %v478 = vunpack.c.h.b16 %v182
    %v479 = vunpack.c.l.b16 %v183
    %v480 = vunpack.c.h.b16 %v183
    %v481 = vunpack.c.l.b16 %v184
    %v482 = vunpack.c.h.b16 %v184
    %v483 = vunpack.c.l.b16 %v185
    %v484 = vunpack.c.h.b16 %v185
    %v485 = vunpack.c.l.b16 %v186
    %v486 = vunpack.c.h.b16 %v186
    %v487 = vpack.c.b16 %v297, %v295
    %v488 = vpack.c.b16 %v298, %v296
    %v489 = vpack.c.b16 %v301, %v299
    %v490 = vpack.c.b16 %v302, %v300
    %v491 = vpack.c.b16 %v305, %v303
    %v492 = vpack.c.b16 %v306, %v304
    %v493 = vpack.c.b16 %v309, %v307
    %v494 = vpack.c.b16 %v310, %v308
    %v495 = vpack.c.b16 %v313, %v311
    %v496 = vpack.c.b16 %v314, %v312
    %v497 = vpack.c.b16 %v317, %v315
    %v498 = vpack.c.b16 %v318, %v316
    %v499 = vpack.c.b16 %v321, %v319
    %v500 = vpack.c.b16 %v322, %v320
    %v501 = vpack.c.b16 %v325, %v323
    %v502 = vpack.c.b16 %v326, %v324
    %v503 = vpack.c.b16 %v329, %v327
    %v504 = vpack.c.b16 %v330, %v328
    %v505 = vpack.c.b16 %v333, %v331
    %v506 = vpack.c.b16 %v334, %v332
    %v507 = vpack.c.b16 %v337, %v335
    %v508 = vpack.c.b16 %v338, %v336
    %v509 = vpack.c.b16 %v341, %v339
    %v510 = vpack.c.b16 %v342, %v340
    %v511 = vpack.c.b16 %v345, %v343
    %v512 = vpack.c.b16 %v346, %v344
    %v513 = vpack.c.b16 %v349, %v347
    %v514 = vpack.c.b16 %v350, %v348
    %v515 = vpack.c.b16 %v353, %v351
    %v516 = vpack.c.b16 %v354, %v352
    %v517 = vpack.c.b16 %v357, %v355
    %v518 = vpack.c.b16 %v358, %v356
    %v519 = vpack.c.b16 %v361, %v359
    %v520 = vpack.c.b16 %v362, %v360
    %v521 = vpack.c.b16 %v365, %v363
    %v522 = vpack.c.b16 %v366, %v364
    %v523 = vpack.c.b16 %v369, %v367
    %v524 = vpack.c.b16 %v370, %v368
    %v525 = vpack.c.b16 %v373, %v371
    %v526 = vpack.c.b16 %v374, %v372
    %v527 = vpack.c.b16 %v377, %v375
    %v528 = vpack.c.b16 %v378, %v376
    %v529 = vpack.c.b16 %v381, %v379
    %v530 = vpack.c.b16 %v382, %v380
    %v531 = vpack.c.b16 %v385, %v383
    %v532 = vpack.c.b16 %v386, %v384
    %v533 = vpack.c.b16 %v389, %v387
    %v534 = vpack.c.b16 %v390, %v388
    %v535 = vpack.c.b16 %v393, %v391
    %v536 = vpack.c.b16 %v394, %v392
    %v537 = vpack.c.b16 %v397, %v395
    %v538 = vpack.c.b16 %v398, %v396
    %v539 = vpack.c.b16 %v401, %v399
    %v540 = vpack.c.b16 %v402, %v400
    %v541 = vpack.c.b16 %v405, %v403
    %v542 = vpack.c.b16 %v406, %v404
    %v543 = vpack.c.b16 %v409, %v407
    %v544 = vpack.c.b16 %v410, %v408
    %v545 = vpack.c.b16 %v413, %v411
    %v546 = vpack.c.b16 %v414, %v412
    %v547 = vpack.c.b16 %v417, %v415
    %v548 = vpack.c.b16 %v418, %v416
    %v549 = vpack.c.b16 %v421, %v419
    %v550 = vpack.c.b16 %v422, %v420
    %v551 = vpack.c.b16 %v425, %v423
    %v552 = vpack.c.b16 %v426, %v424
    %v553 = vpack.c.b16 %v429, %v427
    %v554 = vpack.c.b16 %v430, %v428
    %v555 = vpack.c.b16 %v433, %v431
    %v556 = vpack.c.b16 %v434, %v432
    %v557 = vpack.c.b16 %v437, %v435
    %v558 = vpack.c.b16 %v438, %v436
    %v559 = vpack.c.b16 %v441, %v439
    %v560 = vpack.c.b16 %v442, %v440
    %v561 = vpack.c.b16 %v445, %v443
    %v562 = vpack.c.b16 %v446, %v444
    %v563 = vpack.c.b16 %v449, %v447
    %v564 = vpack.c.b16 %v450, %v448
    %v565 = vpack.c.b16 %v453, %v451
    %v566 = vpack.c.b16 %v454, %v452
    %v567 = vpack.c.b16 %v457, %v455
    %v568 = vpack.c.b16 %v458, %v456
    %v569 = vpack.c.b16 %v461, %v459
    %v570 = vpack.c.b16 %v462, %v460
    %v571 = vpack.c.b16 %v465, %v463
    %v572 = vpack.c.b16 %v466, %v464
    %v573 = vpack.c.b16 %v469, %v467
    %v574 = vpack.c.b16 %v470, %v468
    %v575 = vpack.c.b16 %v473, %v471
    %v576 = vpack.c.b16 %v474, %v472
    %v577 = vpack.c.b16 %v477, %v475
    %v578 = vpack.c.b16 %v478, %v476
    %v579 = vpack.c.b16 %v481, %v479
    %v580 = vpack.c.b16 %v482, %v480
    %v581 = vpack.c.b16 %v485, %v483
    %v582 = vpack.c.b16 %v486, %v484
    %679 = vmatprep.subr.bf16.mxu0 %v502
    %680 = vmatpush1.bf16.msra.mxu0 %v501
    %681 = vmatprep.subr.bf16.mxu0 %v500
    %682 = vmatpush1.bf16.msra.mxu0 %v499
    %683 = vmatprep.subr.bf16.mxu0 %v498
    %684 = vmatpush1.bf16.msra.mxu0 %v497
    %685 = vmatprep.subr.bf16.mxu0 %v496
    %686 = vmatpush1.bf16.msra.mxu0 %v495
    %687 = vmatprep.subr.bf16.mxu0 %v494
    %688 = vmatpush1.bf16.msra.mxu0 %v493
    %689 = vmatprep.subr.bf16.mxu0 %v492
    %690 = vmatpush1.bf16.msra.mxu0 %v491
    %691 = vmatprep.subr.bf16.mxu0 %v490
    %692 = vmatpush1.bf16.msra.mxu0 %v489
    %693 = vmatprep.subr.bf16.mxu0 %v488
    %694 = vmatpush1.bf16.msra.mxu0 %v487
    %695 = vmatprep.subr.bf16.mxu0 %v518
    %696 = vmatpush2.bf16.msra.mxu0 %v517
    %697 = vmatprep.subr.bf16.mxu0 %v516
    %698 = vmatpush2.bf16.msra.mxu0 %v515
    %699 = vmatprep.subr.bf16.mxu0 %v514
    %700 = vmatpush2.bf16.msra.mxu0 %v513
    %701 = vmatprep.subr.bf16.mxu0 %v512
    %702 = vmatpush2.bf16.msra.mxu0 %v511
    %703 = vmatprep.subr.bf16.mxu0 %v510
    %704 = vmatpush2.bf16.msra.mxu0 %v509
    %705 = vmatprep.subr.bf16.mxu0 %v508
    %706 = vmatpush2.bf16.msra.mxu0 %v507
    %707 = vmatprep.subr.bf16.mxu0 %v506
    %708 = vmatpush2.bf16.msra.mxu0 %v505
    %709 = vmatprep.subr.bf16.mxu0 %v504
    %710 = vmatpush2.bf16.msra.mxu0 %v503
    %711 = vmatprep.mubr.bf16.mxu0 %v86
    %712 = vmatmul.mubr.bf16.gmra.mxu0 %v85
    %v713 = vpop.f32.mrf.mxu0
    %v714 = vadd.f32 %v192, %v713
    %v715 = vpop.f32.mrf.mxu0
    %v716 = vadd.f32 %v196, %v715
    %v717 = vpop.f32.mrf.mxu0
    %v718 = vpop.f32.mrf.mxu0
    %719 = vdwg.mxu0
    %720 = vmatprep.subr.bf16.mxu0 %v534
    %721 = vmatpush1.bf16.msra.mxu0 %v533
    %722 = vmatprep.subr.bf16.mxu0 %v532
    %723 = vmatpush1.bf16.msra.mxu0 %v531
    %724 = vmatprep.subr.bf16.mxu0 %v530
    %725 = vmatpush1.bf16.msra.mxu0 %v529
    %726 = vmatprep.subr.bf16.mxu0 %v528
    %727 = vmatpush1.bf16.msra.mxu0 %v527
    %728 = vmatprep.subr.bf16.mxu0 %v526
    %729 = vmatpush1.bf16.msra.mxu0 %v525
    %730 = vmatprep.subr.bf16.mxu0 %v524
    %731 = vmatpush1.bf16.msra.mxu0 %v523
    %732 = vmatprep.subr.bf16.mxu0 %v522
    %733 = vmatpush1.bf16.msra.mxu0 %v521
    %734 = vmatprep.subr.bf16.mxu0 %v520
    %735 = vmatpush1.bf16.msra.mxu0 %v519
    %736 = vmatprep.subr.bf16.mxu0 %v550
    %737 = vmatpush2.bf16.msra.mxu0 %v549
    %738 = vmatprep.subr.bf16.mxu0 %v548
    %739 = vmatpush2.bf16.msra.mxu0 %v547
    %740 = vmatprep.subr.bf16.mxu0 %v546
    %741 = vmatpush2.bf16.msra.mxu0 %v545
    %742 = vmatprep.subr.bf16.mxu0 %v544
    %743 = vmatpush2.bf16.msra.mxu0 %v543
    %744 = vmatprep.subr.bf16.mxu0 %v542
    %745 = vmatpush2.bf16.msra.mxu0 %v541
    %746 = vmatprep.subr.bf16.mxu0 %v540
    %747 = vmatpush2.bf16.msra.mxu0 %v539
    %748 = vmatprep.subr.bf16.mxu0 %v538
    %749 = vmatpush2.bf16.msra.mxu0 %v537
    %750 = vmatprep.subr.bf16.mxu0 %v536
    %751 = vmatpush2.bf16.msra.mxu0 %v535
    %752 = vmatprep.mubr.bf16.mxu0 %v88
    %753 = vmatmul.mubr.bf16.gmra.mxu0 %v87
    %v754 = vpop.f32.mrf.mxu0
    %v755 = vadd.f32 %v714, %v754
    %v756 = vpop.f32.mrf.mxu0
    %v757 = vadd.f32 %v716, %v756
    %v758 = vpop.f32.mrf.mxu0
    %v759 = vpop.f32.mrf.mxu0
    %760 = vdwg.mxu0
    %761 = vmatprep.subr.bf16.mxu0 %v566
    %762 = vmatpush1.bf16.msra.mxu0 %v565
    %763 = vmatprep.subr.bf16.mxu0 %v564
    %764 = vmatpush1.bf16.msra.mxu0 %v563
    %765 = vmatprep.subr.bf16.mxu0 %v562
    %766 = vmatpush1.bf16.msra.mxu0 %v561
    %767 = vmatprep.subr.bf16.mxu0 %v560
    %768 = vmatpush1.bf16.msra.mxu0 %v559
    %769 = vmatprep.subr.bf16.mxu0 %v558
    %770 = vmatpush1.bf16.msra.mxu0 %v557
    %771 = vmatprep.subr.bf16.mxu0 %v556
    %772 = vmatpush1.bf16.msra.mxu0 %v555
    %773 = vmatprep.subr.bf16.mxu0 %v554
    %774 = vmatpush1.bf16.msra.mxu0 %v553
    %775 = vmatprep.subr.bf16.mxu0 %v552
    %776 = vmatpush1.bf16.msra.mxu0 %v551
    %777 = vmatprep.subr.bf16.mxu0 %v582
    %778 = vmatpush2.bf16.msra.mxu0 %v581
    %779 = vmatprep.subr.bf16.mxu0 %v580
    %780 = vmatpush2.bf16.msra.mxu0 %v579
    %781 = vmatprep.subr.bf16.mxu0 %v578
    %782 = vmatpush2.bf16.msra.mxu0 %v577
    %783 = vmatprep.subr.bf16.mxu0 %v576
    %784 = vmatpush2.bf16.msra.mxu0 %v575
    %785 = vmatprep.subr.bf16.mxu0 %v574
    %786 = vmatpush2.bf16.msra.mxu0 %v573
    %787 = vmatprep.subr.bf16.mxu0 %v572
    %788 = vmatpush2.bf16.msra.mxu0 %v571
    %789 = vmatprep.subr.bf16.mxu0 %v570
    %790 = vmatpush2.bf16.msra.mxu0 %v569
    %791 = vmatprep.subr.bf16.mxu0 %v568
    %792 = vmatpush2.bf16.msra.mxu0 %v567
    %793 = vmatprep.mubr.bf16.mxu0 %v90
    %794 = vmatmul.mubr.bf16.gmra.mxu0 %v89
    %v795 = vpop.f32.mrf.mxu0
    %v796 = vadd.f32 %v755, %v795
    %v797 = vpop.f32.mrf.mxu0
    %v798 = vadd.f32 %v757, %v797
    %v799 = vpop.f32.mrf.mxu0
    %v800 = vpop.f32.mrf.mxu0
    %801 = vdwg.mxu0
    %v802 = vmax.f32 %v796, 0.0
    %v803 = vmax.f32 %v798, 0.0
    %v804 = vpack.c.bf16 %v802, %v802
    %v805 = vpack.c.bf16 %v803, %v803
    %v806 = vld [vmem:[%s4] sm:$0xf]
    %v807 = vld [vmem:[%s4 + $0x4] sm:$0xf]
    %v808 = vld [vmem:[%s4 + $0x8] sm:$0xf]
    %v809 = vld [vmem:[%s4 + $0xc] sm:$0xf]
    %v810 = vld [vmem:[%s4 + $0x10] sm:$0xf]
    %v811 = vld [vmem:[%s4 + $0x14] sm:$0xf]
    %v812 = vld [vmem:[%s4 + $0x18] sm:$0xf]
    %v813 = vld [vmem:[%s4 + $0x1c] sm:$0xf]
    %v814 = vld [vmem:[%s4 + $0x20] sm:$0xf]
    %v815 = vld [vmem:[%s4 + $0x24] sm:$0xf]
    %v816 = vld [vmem:[%s4 + $0x28] sm:$0xf]
    %v817 = vld [vmem:[%s4 + $0x2c] sm:$0xf]
    %v818 = vld [vmem:[%s4 + $0x30] sm:$0xf]
    %v819 = vld [vmem:[%s4 + $0x34] sm:$0xf]
    %v820 = vld [vmem:[%s4 + $0x38] sm:$0xf]
    %v821 = vld [vmem:[%s4 + $0x3c] sm:$0xf]
    %v822 = vld [vmem:[%s4 + $0x40] sm:$0xf]
    %v823 = vld [vmem:[%s4 + $0x44] sm:$0xf]
    %v824 = vld [vmem:[%s4 + $0x48] sm:$0xf]
    %v825 = vld [vmem:[%s4 + $0x4c] sm:$0xf]
    %v826 = vld [vmem:[%s4 + $0x50] sm:$0xf]
    %v827 = vld [vmem:[%s4 + $0x54] sm:$0xf]
    %v828 = vld [vmem:[%s4 + $0x58] sm:$0xf]
    %v829 = vld [vmem:[%s4 + $0x5c] sm:$0xf]
    %v830 = vld [vmem:[%s4 + $0x60] sm:$0xf]
    %v831 = vld [vmem:[%s4 + $0x64] sm:$0xf]
    %v832 = vld [vmem:[%s4 + $0x68] sm:$0xf]
    %v833 = vld [vmem:[%s4 + $0x6c] sm:$0xf]
    %v834 = vld [vmem:[%s4 + $0x70] sm:$0xf]
    %v835 = vld [vmem:[%s4 + $0x74] sm:$0xf]
    %v836 = vld [vmem:[%s4 + $0x78] sm:$0xf]
    %v837 = vld [vmem:[%s4 + $0x7c] sm:$0xf]
    %v838 = vld [vmem:[%s5] sm:$0x1]
    %v840 = vlaneseq
    %v841 = vshrl.u32 %v840, 7
    %v842 = vsub.s32 0, %v841
    %v843 = vrot.slane %v838, %v842
    %v877 = vunpack.c.l.b16 %v806
    %v878 = vunpack.c.l.b16 %v807
    %v879 = vunpack.c.l.b16 %v808
    %v880 = vunpack.c.l.b16 %v809
    %v881 = vunpack.c.l.b16 %v810
    %v882 = vunpack.c.l.b16 %v811
    %v883 = vunpack.c.l.b16 %v812
    %v884 = vunpack.c.l.b16 %v813
    %v885 = vunpack.c.l.b16 %v814
    %v886 = vunpack.c.l.b16 %v815
    %v887 = vunpack.c.l.b16 %v816
    %v888 = vunpack.c.l.b16 %v817
    %v889 = vunpack.c.l.b16 %v818
    %v890 = vunpack.c.l.b16 %v819
    %v891 = vunpack.c.l.b16 %v820
    %v892 = vunpack.c.l.b16 %v821
    %v893 = vunpack.c.l.b16 %v822
    %v894 = vunpack.c.l.b16 %v823
    %v895 = vunpack.c.l.b16 %v824
    %v896 = vunpack.c.l.b16 %v825
    %v897 = vunpack.c.l.b16 %v826
    %v898 = vunpack.c.l.b16 %v827
    %v899 = vunpack.c.l.b16 %v828
    %v900 = vunpack.c.l.b16 %v829
    %v901 = vunpack.c.l.b16 %v830
    %v902 = vunpack.c.l.b16 %v831
    %v903 = vunpack.c.l.b16 %v832
    %v904 = vunpack.c.l.b16 %v833
    %v905 = vunpack.c.l.b16 %v834
    %v906 = vunpack.c.l.b16 %v835
    %v907 = vunpack.c.l.b16 %v836
    %v908 = vunpack.c.l.b16 %v837
    %v909 = vpack.c.b16 %v878, %v877
    %v910 = vpack.c.b16 %v880, %v879
    %v911 = vpack.c.b16 %v882, %v881
    %v912 = vpack.c.b16 %v884, %v883
    %v913 = vpack.c.b16 %v886, %v885
    %v914 = vpack.c.b16 %v888, %v887
    %v915 = vpack.c.b16 %v890, %v889
    %v916 = vpack.c.b16 %v892, %v891
    %v917 = vpack.c.b16 %v894, %v893
    %v918 = vpack.c.b16 %v896, %v895
    %v919 = vpack.c.b16 %v898, %v897
    %v920 = vpack.c.b16 %v900, %v899
    %v921 = vpack.c.b16 %v902, %v901
    %v922 = vpack.c.b16 %v904, %v903
    %v923 = vpack.c.b16 %v906, %v905
    %v924 = vpack.c.b16 %v908, %v907
    %941 = vmatprep.subr.bf16.mxu0 0
    %942 = vmatpush1.bf16.msra.mxu0 %v916
    %943 = vmatprep.subr.bf16.mxu0 0
    %944 = vmatpush1.bf16.msra.mxu0 %v915
    %945 = vmatprep.subr.bf16.mxu0 0
    %946 = vmatpush1.bf16.msra.mxu0 %v914
    %947 = vmatprep.subr.bf16.mxu0 0
    %948 = vmatpush1.bf16.msra.mxu0 %v913
    %949 = vmatprep.subr.bf16.mxu0 0
    %950 = vmatpush1.bf16.msra.mxu0 %v912
    %951 = vmatprep.subr.bf16.mxu0 0
    %952 = vmatpush1.bf16.msra.mxu0 %v911
    %953 = vmatprep.subr.bf16.mxu0 0
    %954 = vmatpush1.bf16.msra.mxu0 %v910
    %955 = vmatprep.subr.bf16.mxu0 0
    %956 = vmatpush1.bf16.msra.mxu0 %v909
    %957 = vmatprep.subr.bf16.mxu0 0
    %958 = vmatpush2.bf16.msra.mxu0 %v924
    %959 = vmatprep.subr.bf16.mxu0 0
    %960 = vmatpush2.bf16.msra.mxu0 %v923
    %961 = vmatprep.subr.bf16.mxu0 0
    %962 = vmatpush2.bf16.msra.mxu0 %v922
    %963 = vmatprep.subr.bf16.mxu0 0
    %964 = vmatpush2.bf16.msra.mxu0 %v921
    %965 = vmatprep.subr.bf16.mxu0 0
    %966 = vmatpush2.bf16.msra.mxu0 %v920
    %967 = vmatprep.subr.bf16.mxu0 0
    %968 = vmatpush2.bf16.msra.mxu0 %v919
    %969 = vmatprep.subr.bf16.mxu0 0
    %970 = vmatpush2.bf16.msra.mxu0 %v918
    %971 = vmatprep.subr.bf16.mxu0 0
    %972 = vmatpush2.bf16.msra.mxu0 %v917
    %973 = vmatprep.mubr.bf16.mxu0 %v805
    %974 = vmatmul.mubr.bf16.gmra.mxu0 %v804
    %v975 = vpop.f32.mrf.mxu0
    %v976 = vadd.f32 %v843, %v975
    %v977 = vpop.f32.mrf.mxu0
    %v978 = vpop.f32.mrf.mxu0
    %v979 = vpop.f32.mrf.mxu0
    %980 = vdwg.mxu0
    %981 = vst [vmem:[%s10] sm:$0xff] %v976
    %v982 = vld [vmem:[%s1] sm:$0xff]
    %v983 = vmul.f32 %v976, 0.5
    %v984 = vmul.f32 %v983, 1.442695
    %v985 = vpow.pop %v984
    %987 = vrot.lane.b32.xlu0 %v985, 64
    %v988 = vpop.permute.xlu0 %987
    %v990 = vmul.f32 %v982, %v988
    %v991 = vadd.f32 %v976, %v990
    %v992 = vpack.c.bf16 %v991, %v991
    %v993 = vld [vmem:[#allocation4] sm:$0xff]
    %v994 = vld [vmem:[#allocation4 + $0x8] sm:$0xff]
    %v995 = vld [vmem:[#allocation4 + $0x10] sm:$0xff]
    %v996 = vld [vmem:[#allocation4 + $0x18] sm:$0xff]
    %v997 = vld [vmem:[#allocation4 + $0x20] sm:$0xff]
    %v998 = vld [vmem:[#allocation4 + $0x28] sm:$0xff]
    %v999 = vld [vmem:[#allocation4 + $0x30] sm:$0xff]
    %v1000 = vld [vmem:[#allocation4 + $0x38] sm:$0xff]
    %v1001 = vld [vmem:[%s7] sm:$0x3]
    %v1003 = vlaneseq
    %v1004 = vshrl.u32 %v1003, 7
    %v1005 = vsub.s32 0, %v1004
    %v1006 = vrot.slane %v1001, %v1005
    %v1007 = vlaneseq
    %v1008 = vshrl.u32 %v1007, 7
    %v1009 = vsub.s32 1, %v1008
    %v1010 = vrot.slane %v1001, %v1009
    %v1021 = vunpack.c.l.b16 %v993
    %v1022 = vunpack.c.h.b16 %v993
    %v1023 = vunpack.c.l.b16 %v994
    %v1024 = vunpack.c.h.b16 %v994
    %v1025 = vunpack.c.l.b16 %v995
    %v1026 = vunpack.c.h.b16 %v995
    %v1027 = vunpack.c.l.b16 %v996
    %v1028 = vunpack.c.h.b16 %v996
    %v1029 = vunpack.c.l.b16 %v997
    %v1030 = vunpack.c.h.b16 %v997
    %v1031 = vunpack.c.l.b16 %v998
    %v1032 = vunpack.c.h.b16 %v998
    %v1033 = vunpack.c.l.b16 %v999
    %v1034 = vunpack.c.h.b16 %v999
    %v1035 = vunpack.c.l.b16 %v1000
    %v1036 = vunpack.c.h.b16 %v1000
    %v1037 = vpack.c.b16 %v1023, %v1021
    %v1038 = vpack.c.b16 %v1024, %v1022
    %v1039 = vpack.c.b16 %v1027, %v1025
    %v1040 = vpack.c.b16 %v1028, %v1026
    %v1041 = vpack.c.b16 %v1031, %v1029
    %v1042 = vpack.c.b16 %v1032, %v1030
    %v1043 = vpack.c.b16 %v1035, %v1033
    %v1044 = vpack.c.b16 %v1036, %v1034
    %vm1053 = vcmask 523264
    %v1055 = vsel %vm1053, %v992, 0
    %1057 = vmatprep.subr.bf16.mxu0 0
    %1058 = vmatpush1.bf16.msra.mxu0 0
    %1059 = vmatprep.subr.bf16.mxu0 0
    %1060 = vmatpush1.bf16.msra.mxu0 0
    %1061 = vmatprep.subr.bf16.mxu0 0
    %1062 = vmatpush1.bf16.msra.mxu0 0
    %1063 = vmatprep.subr.bf16.mxu0 0
    %1064 = vmatpush1.bf16.msra.mxu0 0
    %1065 = vmatprep.subr.bf16.mxu0 %v1044
    %1066 = vmatpush1.bf16.msra.mxu0 %v1043
    %1067 = vmatprep.subr.bf16.mxu0 %v1042
    %1068 = vmatpush1.bf16.msra.mxu0 %v1041
    %1069 = vmatprep.subr.bf16.mxu0 %v1040
    %1070 = vmatpush1.bf16.msra.mxu0 %v1039
    %1071 = vmatprep.subr.bf16.mxu0 %v1038
    %1072 = vmatpush1.bf16.msra.mxu0 %v1037
    %1073 = vmatprep.subr.bf16.mxu0 0
    %1074 = vmatpush2.bf16.msra.mxu0 0
    %1075 = vmatprep.subr.bf16.mxu0 0
    %1076 = vmatpush2.bf16.msra.mxu0 0
    %1077 = vmatprep.subr.bf16.mxu0 0
    %1078 = vmatpush2.bf16.msra.mxu0 0
    %1079 = vmatprep.subr.bf16.mxu0 0
    %1080 = vmatpush2.bf16.msra.mxu0 0
    %1081 = vmatprep.subr.bf16.mxu0 0
    %1082 = vmatpush2.bf16.msra.mxu0 0
    %1083 = vmatprep.subr.bf16.mxu0 0
    %1084 = vmatpush2.bf16.msra.mxu0 0
    %1085 = vmatprep.subr.bf16.mxu0 0
    %1086 = vmatpush2.bf16.msra.mxu0 0
    %1087 = vmatprep.subr.bf16.mxu0 0
    %1088 = vmatpush2.bf16.msra.mxu0 0
    %1089 = vmatprep.mubr.bf16.mxu0 0
    %1090 = vmatmul.mubr.bf16.gmra.mxu0 %v1055
    %v1091 = vpop.f32.mrf.mxu0
    %v1092 = vadd.f32 %v1006, %v1091
    %v1093 = vpop.f32.mrf.mxu0
    %v1094 = vadd.f32 %v1010, %v1093
    %v1095 = vpop.f32.mrf.mxu0
    %v1096 = vpop.f32.mrf.mxu0
    %1097 = vdwg.mxu0
    %v1098 = vmax.f32 %v1092, 0.0
    %v1099 = vmax.f32 %v1094, 0.0
    %v1100 = vpack.c.bf16 %v1098, %v1098
    %v1101 = vpack.c.bf16 %v1099, %v1099
    %v1102 = vld [vmem:[#allocation6] sm:$0xff]
    %v1103 = vld [vmem:[#allocation6 + $0x8] sm:$0xff]
    %v1104 = vld [vmem:[#allocation6 + $0x10] sm:$0xff]
    %v1105 = vld [vmem:[#allocation6 + $0x18] sm:$0xff]
    %v1106 = vld [vmem:[#allocation6 + $0x20] sm:$0xff]
    %v1107 = vld [vmem:[#allocation6 + $0x28] sm:$0xff]
    %v1108 = vld [vmem:[#allocation6 + $0x30] sm:$0xff]
    %v1109 = vld [vmem:[#allocation6 + $0x38] sm:$0xff]
    %v1110 = vld [vmem:[#allocation6 + $0x40] sm:$0xff]
    %v1111 = vld [vmem:[#allocation6 + $0x48] sm:$0xff]
    %v1112 = vld [vmem:[#allocation6 + $0x50] sm:$0xff]
    %v1113 = vld [vmem:[#allocation6 + $0x58] sm:$0xff]
    %v1114 = vld [vmem:[#allocation6 + $0x60] sm:$0xff]
    %v1115 = vld [vmem:[#allocation6 + $0x68] sm:$0xff]
    %v1116 = vld [vmem:[#allocation6 + $0x70] sm:$0xff]
    %v1117 = vld [vmem:[#allocation6 + $0x78] sm:$0xff]
    %v1118 = vld [vmem:[#allocation6 + $0x80] sm:$0xff]
    %v1119 = vld [vmem:[#allocation6 + $0x88] sm:$0xff]
    %v1120 = vld [vmem:[#allocation6 + $0x90] sm:$0xff]
    %v1121 = vld [vmem:[#allocation6 + $0x98] sm:$0xff]
    %v1122 = vld [vmem:[#allocation6 + $0xa0] sm:$0xff]
    %v1123 = vld [vmem:[#allocation6 + $0xa8] sm:$0xff]
    %v1124 = vld [vmem:[#allocation6 + $0xb0] sm:$0xff]
    %v1125 = vld [vmem:[#allocation6 + $0xb8] sm:$0xff]
    %v1126 = vld [vmem:[#allocation6 + $0xc0] sm:$0xff]
    %v1127 = vld [vmem:[#allocation6 + $0xc8] sm:$0xff]
    %v1128 = vld [vmem:[#allocation6 + $0xd0] sm:$0xff]
    %v1129 = vld [vmem:[#allocation6 + $0xd8] sm:$0xff]
    %v1130 = vld [vmem:[#allocation6 + $0xe0] sm:$0xff]
    %v1131 = vld [vmem:[#allocation6 + $0xe8] sm:$0xff]
    %v1132 = vld [vmem:[#allocation6 + $0xf0] sm:$0xff]
    %v1133 = vld [vmem:[#allocation6 + $0xf8] sm:$0xff]
    %v1134 = vld [vmem:[#allocation6 + $0x100] sm:$0xff]
    %v1135 = vld [vmem:[#allocation6 + $0x108] sm:$0xff]
    %v1136 = vld [vmem:[#allocation6 + $0x110] sm:$0xff]
    %v1137 = vld [vmem:[#allocation6 + $0x118] sm:$0xff]
    %v1138 = vld [vmem:[#allocation6 + $0x120] sm:$0xff]
    %v1139 = vld [vmem:[#allocation6 + $0x128] sm:$0xff]
    %v1140 = vld [vmem:[#allocation6 + $0x130] sm:$0xff]
    %v1141 = vld [vmem:[#allocation6 + $0x138] sm:$0xff]
    %v1142 = vld [vmem:[#allocation6 + $0x140] sm:$0xff]
    %v1143 = vld [vmem:[#allocation6 + $0x148] sm:$0xff]
    %v1144 = vld [vmem:[#allocation6 + $0x150] sm:$0xff]
    %v1145 = vld [vmem:[#allocation6 + $0x158] sm:$0xff]
    %v1146 = vld [vmem:[#allocation6 + $0x160] sm:$0xff]
    %v1147 = vld [vmem:[#allocation6 + $0x168] sm:$0xff]
    %v1148 = vld [vmem:[#allocation6 + $0x170] sm:$0xff]
    %v1149 = vld [vmem:[#allocation6 + $0x178] sm:$0xff]
    %v1150 = vld [vmem:[#allocation6 + $0x180] sm:$0xff]
    %v1151 = vld [vmem:[#allocation6 + $0x188] sm:$0xff]
    %v1152 = vld [vmem:[#allocation6 + $0x190] sm:$0xff]
    %v1153 = vld [vmem:[#allocation6 + $0x198] sm:$0xff]
    %v1154 = vld [vmem:[#allocation6 + $0x1a0] sm:$0xff]
    %v1155 = vld [vmem:[#allocation6 + $0x1a8] sm:$0xff]
    %v1156 = vld [vmem:[#allocation6 + $0x1b0] sm:$0xff]
    %v1157 = vld [vmem:[#allocation6 + $0x1b8] sm:$0xff]
    %v1158 = vld [vmem:[#allocation6 + $0x1c0] sm:$0xff]
    %v1159 = vld [vmem:[#allocation6 + $0x1c8] sm:$0xff]
    %v1160 = vld [vmem:[#allocation6 + $0x1d0] sm:$0xff]
    %v1161 = vld [vmem:[#allocation6 + $0x1d8] sm:$0xff]
    %v1162 = vld [vmem:[#allocation6 + $0x1e0] sm:$0xff]
    %v1163 = vld [vmem:[#allocation6 + $0x1e8] sm:$0xff]
    %v1164 = vld [vmem:[#allocation6 + $0x1f0] sm:$0xff]
    %v1165 = vld [vmem:[#allocation6 + $0x1f8] sm:$0xff]
    %v1166 = vld [vmem:[#allocation6 + $0x200] sm:$0xff]
    %v1167 = vld [vmem:[#allocation6 + $0x208] sm:$0xff]
    %v1168 = vld [vmem:[#allocation6 + $0x210] sm:$0xff]
    %v1169 = vld [vmem:[#allocation6 + $0x218] sm:$0xff]
    %v1170 = vld [vmem:[#allocation6 + $0x220] sm:$0xff]
    %v1171 = vld [vmem:[#allocation6 + $0x228] sm:$0xff]
    %v1172 = vld [vmem:[#allocation6 + $0x230] sm:$0xff]
    %v1173 = vld [vmem:[#allocation6 + $0x238] sm:$0xff]
    %v1174 = vld [vmem:[#allocation6 + $0x240] sm:$0xff]
    %v1175 = vld [vmem:[#allocation6 + $0x248] sm:$0xff]
    %v1176 = vld [vmem:[#allocation6 + $0x250] sm:$0xff]
    %v1177 = vld [vmem:[#allocation6 + $0x258] sm:$0xff]
    %v1178 = vld [vmem:[#allocation6 + $0x260] sm:$0xff]
    %v1179 = vld [vmem:[#allocation6 + $0x268] sm:$0xff]
    %v1180 = vld [vmem:[#allocation6 + $0x270] sm:$0xff]
    %v1181 = vld [vmem:[#allocation6 + $0x278] sm:$0xff]
    %v1182 = vld [vmem:[#allocation6 + $0x280] sm:$0xff]
    %v1183 = vld [vmem:[#allocation6 + $0x288] sm:$0xff]
    %v1184 = vld [vmem:[#allocation6 + $0x290] sm:$0xff]
    %v1185 = vld [vmem:[#allocation6 + $0x298] sm:$0xff]
    %v1186 = vld [vmem:[#allocation6 + $0x2a0] sm:$0xff]
    %v1187 = vld [vmem:[#allocation6 + $0x2a8] sm:$0xff]
    %v1188 = vld [vmem:[#allocation6 + $0x2b0] sm:$0xff]
    %v1189 = vld [vmem:[#allocation6 + $0x2b8] sm:$0xff]
    %v1190 = vld [vmem:[#allocation6 + $0x2c0] sm:$0xff]
    %v1191 = vld [vmem:[#allocation6 + $0x2c8] sm:$0xff]
    %v1192 = vld [vmem:[#allocation6 + $0x2d0] sm:$0xff]
    %v1193 = vld [vmem:[#allocation6 + $0x2d8] sm:$0xff]
    %v1194 = vld [vmem:[#allocation6 + $0x2e0] sm:$0xff]
    %v1195 = vld [vmem:[#allocation6 + $0x2e8] sm:$0xff]
    %v1196 = vld [vmem:[#allocation6 + $0x2f0] sm:$0xff]
    %v1197 = vld [vmem:[#allocation6 + $0x2f8] sm:$0xff]
    %v1198 = vld [vmem:[%s9] sm:$0x3f]
    %v1200 = vlaneseq
    %v1201 = vshrl.u32 %v1200, 7
    %v1202 = vsub.s32 0, %v1201
    %v1203 = vrot.slane %v1198, %v1202
    %v1204 = vlaneseq
    %v1205 = vshrl.u32 %v1204, 7
    %v1206 = vsub.s32 1, %v1205
    %v1207 = vrot.slane %v1198, %v1206
    %v1208 = vlaneseq
    %v1209 = vshrl.u32 %v1208, 7
    %v1210 = vsub.s32 2, %v1209
    %v1211 = vrot.slane %v1198, %v1210
    %v1212 = vlaneseq
    %v1213 = vshrl.u32 %v1212, 7
    %v1214 = vsub.s32 3, %v1213
    %v1215 = vrot.slane %v1198, %v1214
    %v1216 = vlaneseq
    %v1217 = vshrl.u32 %v1216, 7
    %v1218 = vsub.s32 4, %v1217
    %v1219 = vrot.slane %v1198, %v1218
    %v1220 = vlaneseq
    %v1221 = vshrl.u32 %v1220, 7
    %v1222 = vsub.s32 5, %v1221
    %v1223 = vrot.slane %v1198, %v1222
    %v1326 = vunpack.c.l.b16 %v1102
    %v1327 = vunpack.c.h.b16 %v1102
    %v1328 = vunpack.c.l.b16 %v1103
    %v1329 = vunpack.c.h.b16 %v1103
    %v1330 = vunpack.c.l.b16 %v1104
    %v1331 = vunpack.c.h.b16 %v1104
    %v1332 = vunpack.c.l.b16 %v1105
    %v1333 = vunpack.c.h.b16 %v1105
    %v1334 = vunpack.c.l.b16 %v1106
    %v1335 = vunpack.c.h.b16 %v1106
    %v1336 = vunpack.c.l.b16 %v1107
    %v1337 = vunpack.c.h.b16 %v1107
    %v1338 = vunpack.c.l.b16 %v1108
    %v1339 = vunpack.c.h.b16 %v1108
    %v1340 = vunpack.c.l.b16 %v1109
    %v1341 = vunpack.c.h.b16 %v1109
    %v1342 = vunpack.c.l.b16 %v1110
    %v1343 = vunpack.c.h.b16 %v1110
    %v1344 = vunpack.c.l.b16 %v1111
    %v1345 = vunpack.c.h.b16 %v1111
    %v1346 = vunpack.c.l.b16 %v1112
    %v1347 = vunpack.c.h.b16 %v1112
    %v1348 = vunpack.c.l.b16 %v1113
    %v1349 = vunpack.c.h.b16 %v1113
    %v1350 = vunpack.c.l.b16 %v1114
    %v1351 = vunpack.c.h.b16 %v1114
    %v1352 = vunpack.c.l.b16 %v1115
    %v1353 = vunpack.c.h.b16 %v1115
    %v1354 = vunpack.c.l.b16 %v1116
    %v1355 = vunpack.c.h.b16 %v1116
    %v1356 = vunpack.c.l.b16 %v1117
    %v1357 = vunpack.c.h.b16 %v1117
    %v1358 = vunpack.c.l.b16 %v1118
    %v1359 = vunpack.c.h.b16 %v1118
    %v1360 = vunpack.c.l.b16 %v1119
    %v1361 = vunpack.c.h.b16 %v1119
    %v1362 = vunpack.c.l.b16 %v1120
    %v1363 = vunpack.c.h.b16 %v1120
    %v1364 = vunpack.c.l.b16 %v1121
    %v1365 = vunpack.c.h.b16 %v1121
    %v1366 = vunpack.c.l.b16 %v1122
    %v1367 = vunpack.c.h.b16 %v1122
    %v1368 = vunpack.c.l.b16 %v1123
    %v1369 = vunpack.c.h.b16 %v1123
    %v1370 = vunpack.c.l.b16 %v1124
    %v1371 = vunpack.c.h.b16 %v1124
    %v1372 = vunpack.c.l.b16 %v1125
    %v1373 = vunpack.c.h.b16 %v1125
    %v1374 = vunpack.c.l.b16 %v1126
    %v1375 = vunpack.c.h.b16 %v1126
    %v1376 = vunpack.c.l.b16 %v1127
    %v1377 = vunpack.c.h.b16 %v1127
    %v1378 = vunpack.c.l.b16 %v1128
    %v1379 = vunpack.c.h.b16 %v1128
    %v1380 = vunpack.c.l.b16 %v1129
    %v1381 = vunpack.c.h.b16 %v1129
    %v1382 = vunpack.c.l.b16 %v1130
    %v1383 = vunpack.c.h.b16 %v1130
    %v1384 = vunpack.c.l.b16 %v1131
    %v1385 = vunpack.c.h.b16 %v1131
    %v1386 = vunpack.c.l.b16 %v1132
    %v1387 = vunpack.c.h.b16 %v1132
    %v1388 = vunpack.c.l.b16 %v1133
    %v1389 = vunpack.c.h.b16 %v1133
    %v1390 = vunpack.c.l.b16 %v1134
    %v1391 = vunpack.c.h.b16 %v1134
    %v1392 = vunpack.c.l.b16 %v1135
    %v1393 = vunpack.c.h.b16 %v1135
    %v1394 = vunpack.c.l.b16 %v1136
    %v1395 = vunpack.c.h.b16 %v1136
    %v1396 = vunpack.c.l.b16 %v1137
    %v1397 = vunpack.c.h.b16 %v1137
    %v1398 = vunpack.c.l.b16 %v1138
    %v1399 = vunpack.c.h.b16 %v1138
    %v1400 = vunpack.c.l.b16 %v1139
    %v1401 = vunpack.c.h.b16 %v1139
    %v1402 = vunpack.c.l.b16 %v1140
    %v1403 = vunpack.c.h.b16 %v1140
    %v1404 = vunpack.c.l.b16 %v1141
    %v1405 = vunpack.c.h.b16 %v1141
    %v1406 = vunpack.c.l.b16 %v1142
    %v1407 = vunpack.c.h.b16 %v1142
    %v1408 = vunpack.c.l.b16 %v1143
    %v1409 = vunpack.c.h.b16 %v1143
    %v1410 = vunpack.c.l.b16 %v1144
    %v1411 = vunpack.c.h.b16 %v1144
    %v1412 = vunpack.c.l.b16 %v1145
    %v1413 = vunpack.c.h.b16 %v1145
    %v1414 = vunpack.c.l.b16 %v1146
    %v1415 = vunpack.c.h.b16 %v1146
    %v1416 = vunpack.c.l.b16 %v1147
    %v1417 = vunpack.c.h.b16 %v1147
    %v1418 = vunpack.c.l.b16 %v1148
    %v1419 = vunpack.c.h.b16 %v1148
    %v1420 = vunpack.c.l.b16 %v1149
    %v1421 = vunpack.c.h.b16 %v1149
    %v1422 = vunpack.c.l.b16 %v1150
    %v1423 = vunpack.c.h.b16 %v1150
    %v1424 = vunpack.c.l.b16 %v1151
    %v1425 = vunpack.c.h.b16 %v1151
    %v1426 = vunpack.c.l.b16 %v1152
    %v1427 = vunpack.c.h.b16 %v1152
    %v1428 = vunpack.c.l.b16 %v1153
    %v1429 = vunpack.c.h.b16 %v1153
    %v1430 = vunpack.c.l.b16 %v1154
    %v1431 = vunpack.c.h.b16 %v1154
    %v1432 = vunpack.c.l.b16 %v1155
    %v1433 = vunpack.c.h.b16 %v1155
    %v1434 = vunpack.c.l.b16 %v1156
    %v1435 = vunpack.c.h.b16 %v1156
    %v1436 = vunpack.c.l.b16 %v1157
    %v1437 = vunpack.c.h.b16 %v1157
    %v1438 = vunpack.c.l.b16 %v1158
    %v1439 = vunpack.c.h.b16 %v1158
    %v1440 = vunpack.c.l.b16 %v1159
    %v1441 = vunpack.c.h.b16 %v1159
    %v1442 = vunpack.c.l.b16 %v1160
    %v1443 = vunpack.c.h.b16 %v1160
    %v1444 = vunpack.c.l.b16 %v1161
    %v1445 = vunpack.c.h.b16 %v1161
    %v1446 = vunpack.c.l.b16 %v1162
    %v1447 = vunpack.c.h.b16 %v1162
    %v1448 = vunpack.c.l.b16 %v1163
    %v1449 = vunpack.c.h.b16 %v1163
    %v1450 = vunpack.c.l.b16 %v1164
    %v1451 = vunpack.c.h.b16 %v1164
    %v1452 = vunpack.c.l.b16 %v1165
    %v1453 = vunpack.c.h.b16 %v1165
    %v1454 = vunpack.c.l.b16 %v1166
    %v1455 = vunpack.c.h.b16 %v1166
    %v1456 = vunpack.c.l.b16 %v1167
    %v1457 = vunpack.c.h.b16 %v1167
    %v1458 = vunpack.c.l.b16 %v1168
    %v1459 = vunpack.c.h.b16 %v1168
    %v1460 = vunpack.c.l.b16 %v1169
    %v1461 = vunpack.c.h.b16 %v1169
    %v1462 = vunpack.c.l.b16 %v1170
    %v1463 = vunpack.c.h.b16 %v1170
    %v1464 = vunpack.c.l.b16 %v1171
    %v1465 = vunpack.c.h.b16 %v1171
    %v1466 = vunpack.c.l.b16 %v1172
    %v1467 = vunpack.c.h.b16 %v1172
    %v1468 = vunpack.c.l.b16 %v1173
    %v1469 = vunpack.c.h.b16 %v1173
    %v1470 = vunpack.c.l.b16 %v1174
    %v1471 = vunpack.c.h.b16 %v1174
    %v1472 = vunpack.c.l.b16 %v1175
    %v1473 = vunpack.c.h.b16 %v1175
    %v1474 = vunpack.c.l.b16 %v1176
    %v1475 = vunpack.c.h.b16 %v1176
    %v1476 = vunpack.c.l.b16 %v1177
    %v1477 = vunpack.c.h.b16 %v1177
    %v1478 = vunpack.c.l.b16 %v1178
    %v1479 = vunpack.c.h.b16 %v1178
    %v1480 = vunpack.c.l.b16 %v1179
    %v1481 = vunpack.c.h.b16 %v1179
    %v1482 = vunpack.c.l.b16 %v1180
    %v1483 = vunpack.c.h.b16 %v1180
    %v1484 = vunpack.c.l.b16 %v1181
    %v1485 = vunpack.c.h.b16 %v1181
    %v1486 = vunpack.c.l.b16 %v1182
    %v1487 = vunpack.c.h.b16 %v1182
    %v1488 = vunpack.c.l.b16 %v1183
    %v1489 = vunpack.c.h.b16 %v1183
    %v1490 = vunpack.c.l.b16 %v1184
    %v1491 = vunpack.c.h.b16 %v1184
    %v1492 = vunpack.c.l.b16 %v1185
    %v1493 = vunpack.c.h.b16 %v1185
    %v1494 = vunpack.c.l.b16 %v1186
    %v1495 = vunpack.c.h.b16 %v1186
    %v1496 = vunpack.c.l.b16 %v1187
    %v1497 = vunpack.c.h.b16 %v1187
    %v1498 = vunpack.c.l.b16 %v1188
    %v1499 = vunpack.c.h.b16 %v1188
    %v1500 = vunpack.c.l.b16 %v1189
    %v1501 = vunpack.c.h.b16 %v1189
    %v1502 = vunpack.c.l.b16 %v1190
    %v1503 = vunpack.c.h.b16 %v1190
    %v1504 = vunpack.c.l.b16 %v1191
    %v1505 = vunpack.c.h.b16 %v1191
    %v1506 = vunpack.c.l.b16 %v1192
    %v1507 = vunpack.c.h.b16 %v1192
    %v1508 = vunpack.c.l.b16 %v1193
    %v1509 = vunpack.c.h.b16 %v1193
    %v1510 = vunpack.c.l.b16 %v1194
    %v1511 = vunpack.c.h.b16 %v1194
    %v1512 = vunpack.c.l.b16 %v1195
    %v1513 = vunpack.c.h.b16 %v1195
    %v1514 = vunpack.c.l.b16 %v1196
    %v1515 = vunpack.c.h.b16 %v1196
    %v1516 = vunpack.c.l.b16 %v1197
    %v1517 = vunpack.c.h.b16 %v1197
    %v1518 = vpack.c.b16 %v1332, %v1326
    %v1519 = vpack.c.b16 %v1333, %v1327
    %v1520 = vpack.c.b16 %v1334, %v1328
    %v1521 = vpack.c.b16 %v1335, %v1329
    %v1522 = vpack.c.b16 %v1336, %v1330
    %v1523 = vpack.c.b16 %v1337, %v1331
    %v1524 = vpack.c.b16 %v1344, %v1338
    %v1525 = vpack.c.b16 %v1345, %v1339
    %v1526 = vpack.c.b16 %v1346, %v1340
    %v1527 = vpack.c.b16 %v1347, %v1341
    %v1528 = vpack.c.b16 %v1348, %v1342
    %v1529 = vpack.c.b16 %v1349, %v1343
    %v1530 = vpack.c.b16 %v1356, %v1350
    %v1531 = vpack.c.b16 %v1357, %v1351
    %v1532 = vpack.c.b16 %v1358, %v1352
    %v1533 = vpack.c.b16 %v1359, %v1353
    %v1534 = vpack.c.b16 %v1360, %v1354
    %v1535 = vpack.c.b16 %v1361, %v1355
    %v1536 = vpack.c.b16 %v1368, %v1362
    %v1537 = vpack.c.b16 %v1369, %v1363
    %v1538 = vpack.c.b16 %v1370, %v1364
    %v1539 = vpack.c.b16 %v1371, %v1365
    %v1540 = vpack.c.b16 %v1372, %v1366
    %v1541 = vpack.c.b16 %v1373, %v1367
    %v1542 = vpack.c.b16 %v1380, %v1374
    %v1543 = vpack.c.b16 %v1381, %v1375
    %v1544 = vpack.c.b16 %v1382, %v1376
    %v1545 = vpack.c.b16 %v1383, %v1377
    %v1546 = vpack.c.b16 %v1384, %v1378
    %v1547 = vpack.c.b16 %v1385, %v1379
    %v1548 = vpack.c.b16 %v1392, %v1386
    %v1549 = vpack.c.b16 %v1393, %v1387
    %v1550 = vpack.c.b16 %v1394, %v1388
    %v1551 = vpack.c.b16 %v1395, %v1389
    %v1552 = vpack.c.b16 %v1396, %v1390
    %v1553 = vpack.c.b16 %v1397, %v1391
    %v1554 = vpack.c.b16 %v1404, %v1398
    %v1555 = vpack.c.b16 %v1405, %v1399
    %v1556 = vpack.c.b16 %v1406, %v1400
    %v1557 = vpack.c.b16 %v1407, %v1401
    %v1558 = vpack.c.b16 %v1408, %v1402
    %v1559 = vpack.c.b16 %v1409, %v1403
    %v1560 = vpack.c.b16 %v1416, %v1410
    %v1561 = vpack.c.b16 %v1417, %v1411
    %v1562 = vpack.c.b16 %v1418, %v1412
    %v1563 = vpack.c.b16 %v1419, %v1413
    %v1564 = vpack.c.b16 %v1420, %v1414
    %v1565 = vpack.c.b16 %v1421, %v1415
    %v1566 = vpack.c.b16 %v1428, %v1422
    %v1567 = vpack.c.b16 %v1429, %v1423
    %v1568 = vpack.c.b16 %v1430, %v1424
    %v1569 = vpack.c.b16 %v1431, %v1425
    %v1570 = vpack.c.b16 %v1432, %v1426
    %v1571 = vpack.c.b16 %v1433, %v1427
    %v1572 = vpack.c.b16 %v1440, %v1434
    %v1573 = vpack.c.b16 %v1441, %v1435
    %v1574 = vpack.c.b16 %v1442, %v1436
    %v1575 = vpack.c.b16 %v1443, %v1437
    %v1576 = vpack.c.b16 %v1444, %v1438
    %v1577 = vpack.c.b16 %v1445, %v1439
    %v1578 = vpack.c.b16 %v1452, %v1446
    %v1579 = vpack.c.b16 %v1453, %v1447
    %v1580 = vpack.c.b16 %v1454, %v1448
    %v1581 = vpack.c.b16 %v1455, %v1449
    %v1582 = vpack.c.b16 %v1456, %v1450
    %v1583 = vpack.c.b16 %v1457, %v1451
    %v1584 = vpack.c.b16 %v1464, %v1458
    %v1585 = vpack.c.b16 %v1465, %v1459
    %v1586 = vpack.c.b16 %v1466, %v1460
    %v1587 = vpack.c.b16 %v1467, %v1461
    %v1588 = vpack.c.b16 %v1468, %v1462
    %v1589 = vpack.c.b16 %v1469, %v1463
    %v1590 = vpack.c.b16 %v1476, %v1470
    %v1591 = vpack.c.b16 %v1477, %v1471
    %v1592 = vpack.c.b16 %v1478, %v1472
    %v1593 = vpack.c.b16 %v1479, %v1473
    %v1594 = vpack.c.b16 %v1480, %v1474
    %v1595 = vpack.c.b16 %v1481, %v1475
    %v1596 = vpack.c.b16 %v1488, %v1482
    %v1597 = vpack.c.b16 %v1489, %v1483
    %v1598 = vpack.c.b16 %v1490, %v1484
    %v1599 = vpack.c.b16 %v1491, %v1485
    %v1600 = vpack.c.b16 %v1492, %v1486
    %v1601 = vpack.c.b16 %v1493, %v1487
    %v1602 = vpack.c.b16 %v1500, %v1494
    %v1603 = vpack.c.b16 %v1501, %v1495
    %v1604 = vpack.c.b16 %v1502, %v1496
    %v1605 = vpack.c.b16 %v1503, %v1497
    %v1606 = vpack.c.b16 %v1504, %v1498
    %v1607 = vpack.c.b16 %v1505, %v1499
    %v1608 = vpack.c.b16 %v1512, %v1506
    %v1609 = vpack.c.b16 %v1513, %v1507
    %v1610 = vpack.c.b16 %v1514, %v1508
    %v1611 = vpack.c.b16 %v1515, %v1509
    %v1612 = vpack.c.b16 %v1516, %v1510
    %v1613 = vpack.c.b16 %v1517, %v1511
    %1710 = vmatprep.subr.bf16.mxu0 %v1561
    %1711 = vmatpush1.bf16.msra.mxu0 %v1560
    %1712 = vmatprep.subr.bf16.mxu0 %v1555
    %1713 = vmatpush1.bf16.msra.mxu0 %v1554
    %1714 = vmatprep.subr.bf16.mxu0 %v1549
    %1715 = vmatpush1.bf16.msra.mxu0 %v1548
    %1716 = vmatprep.subr.bf16.mxu0 %v1543
    %1717 = vmatpush1.bf16.msra.mxu0 %v1542
    %1718 = vmatprep.subr.bf16.mxu0 %v1537
    %1719 = vmatpush1.bf16.msra.mxu0 %v1536
    %1720 = vmatprep.subr.bf16.mxu0 %v1531
    %1721 = vmatpush1.bf16.msra.mxu0 %v1530
    %1722 = vmatprep.subr.bf16.mxu0 %v1525
    %1723 = vmatpush1.bf16.msra.mxu0 %v1524
    %1724 = vmatprep.subr.bf16.mxu0 %v1519
    %1725 = vmatpush1.bf16.msra.mxu0 %v1518
    %1726 = vmatprep.subr.bf16.mxu0 %v1609
    %1727 = vmatpush2.bf16.msra.mxu0 %v1608
    %1728 = vmatprep.subr.bf16.mxu0 %v1603
    %1729 = vmatpush2.bf16.msra.mxu0 %v1602
    %1730 = vmatprep.subr.bf16.mxu0 %v1597
    %1731 = vmatpush2.bf16.msra.mxu0 %v1596
    %1732 = vmatprep.subr.bf16.mxu0 %v1591
    %1733 = vmatpush2.bf16.msra.mxu0 %v1590
    %1734 = vmatprep.subr.bf16.mxu0 %v1585
    %1735 = vmatpush2.bf16.msra.mxu0 %v1584
    %1736 = vmatprep.subr.bf16.mxu0 %v1579
    %1737 = vmatpush2.bf16.msra.mxu0 %v1578
    %1738 = vmatprep.subr.bf16.mxu0 %v1573
    %1739 = vmatpush2.bf16.msra.mxu0 %v1572
    %1740 = vmatprep.subr.bf16.mxu0 %v1567
    %1741 = vmatpush2.bf16.msra.mxu0 %v1566
    %1742 = vmatprep.mubr.bf16.mxu0 %v1101
    %1743 = vmatmul.mubr.bf16.gmra.mxu0 %v1100
    %v1744 = vpop.f32.mrf.mxu0
    %v1745 = vadd.f32 %v1203, %v1744
    %v1746 = vpop.f32.mrf.mxu0
    %v1747 = vadd.f32 %v1207, %v1746
    %v1748 = vpop.f32.mrf.mxu0
    %v1749 = vpop.f32.mrf.mxu0
    %1750 = vdwg.mxu0
    %1751 = vmatprep.subr.bf16.mxu0 %v1563
    %1752 = vmatpush1.bf16.msra.mxu0 %v1562
    %1753 = vmatprep.subr.bf16.mxu0 %v1557
    %1754 = vmatpush1.bf16.msra.mxu0 %v1556
    %1755 = vmatprep.subr.bf16.mxu0 %v1551
    %1756 = vmatpush1.bf16.msra.mxu0 %v1550
    %1757 = vmatprep.subr.bf16.mxu0 %v1545
    %1758 = vmatpush1.bf16.msra.mxu0 %v1544
    %1759 = vmatprep.subr.bf16.mxu0 %v1539
    %1760 = vmatpush1.bf16.msra.mxu0 %v1538
    %1761 = vmatprep.subr.bf16.mxu0 %v1533
    %1762 = vmatpush1.bf16.msra.mxu0 %v1532
    %1763 = vmatprep.subr.bf16.mxu0 %v1527
    %1764 = vmatpush1.bf16.msra.mxu0 %v1526
    %1765 = vmatprep.subr.bf16.mxu0 %v1521
    %1766 = vmatpush1.bf16.msra.mxu0 %v1520
    %1767 = vmatprep.subr.bf16.mxu0 %v1611
    %1768 = vmatpush2.bf16.msra.mxu0 %v1610
    %1769 = vmatprep.subr.bf16.mxu0 %v1605
    %1770 = vmatpush2.bf16.msra.mxu0 %v1604
    %1771 = vmatprep.subr.bf16.mxu0 %v1599
    %1772 = vmatpush2.bf16.msra.mxu0 %v1598
    %1773 = vmatprep.subr.bf16.mxu0 %v1593
    %1774 = vmatpush2.bf16.msra.mxu0 %v1592
    %1775 = vmatprep.subr.bf16.mxu0 %v1587
    %1776 = vmatpush2.bf16.msra.mxu0 %v1586
    %1777 = vmatprep.subr.bf16.mxu0 %v1581
    %1778 = vmatpush2.bf16.msra.mxu0 %v1580
    %1779 = vmatprep.subr.bf16.mxu0 %v1575
    %1780 = vmatpush2.bf16.msra.mxu0 %v1574
    %1781 = vmatprep.subr.bf16.mxu0 %v1569
    %1782 = vmatpush2.bf16.msra.mxu0 %v1568
    %1783 = vmatprep.mubr.bf16.mxu0 %v1101
    %1784 = vmatmul.mubr.bf16.gmra.mxu0 %v1100
    %v1785 = vpop.f32.mrf.mxu0
    %v1786 = vadd.f32 %v1211, %v1785
    %v1787 = vpop.f32.mrf.mxu0
    %v1788 = vadd.f32 %v1215, %v1787
    %v1789 = vpop.f32.mrf.mxu0
    %v1790 = vpop.f32.mrf.mxu0
    %1791 = vdwg.mxu0
    %1792 = vmatprep.subr.bf16.mxu0 %v1565
    %1793 = vmatpush1.bf16.msra.mxu0 %v1564
    %1794 = vmatprep.subr.bf16.mxu0 %v1559
    %1795 = vmatpush1.bf16.msra.mxu0 %v1558
    %1796 = vmatprep.subr.bf16.mxu0 %v1553
    %1797 = vmatpush1.bf16.msra.mxu0 %v1552
    %1798 = vmatprep.subr.bf16.mxu0 %v1547
    %1799 = vmatpush1.bf16.msra.mxu0 %v1546
    %1800 = vmatprep.subr.bf16.mxu0 %v1541
    %1801 = vmatpush1.bf16.msra.mxu0 %v1540
    %1802 = vmatprep.subr.bf16.mxu0 %v1535
    %1803 = vmatpush1.bf16.msra.mxu0 %v1534
    %1804 = vmatprep.subr.bf16.mxu0 %v1529
    %1805 = vmatpush1.bf16.msra.mxu0 %v1528
    %1806 = vmatprep.subr.bf16.mxu0 %v1523
    %1807 = vmatpush1.bf16.msra.mxu0 %v1522
    %1808 = vmatprep.subr.bf16.mxu0 %v1613
    %1809 = vmatpush2.bf16.msra.mxu0 %v1612
    %1810 = vmatprep.subr.bf16.mxu0 %v1607
    %1811 = vmatpush2.bf16.msra.mxu0 %v1606
    %1812 = vmatprep.subr.bf16.mxu0 %v1601
    %1813 = vmatpush2.bf16.msra.mxu0 %v1600
    %1814 = vmatprep.subr.bf16.mxu0 %v1595
    %1815 = vmatpush2.bf16.msra.mxu0 %v1594
    %1816 = vmatprep.subr.bf16.mxu0 %v1589
    %1817 = vmatpush2.bf16.msra.mxu0 %v1588
    %1818 = vmatprep.subr.bf16.mxu0 %v1583
    %1819 = vmatpush2.bf16.msra.mxu0 %v1582
    %1820 = vmatprep.subr.bf16.mxu0 %v1577
    %1821 = vmatpush2.bf16.msra.mxu0 %v1576
    %1822 = vmatprep.subr.bf16.mxu0 %v1571
    %1823 = vmatpush2.bf16.msra.mxu0 %v1570
    %1824 = vmatprep.mubr.bf16.mxu0 %v1101
    %1825 = vmatmul.mubr.bf16.gmra.mxu0 %v1100
    %v1826 = vpop.f32.mrf.mxu0
    %v1827 = vadd.f32 %v1219, %v1826
    %v1828 = vpop.f32.mrf.mxu0
    %v1829 = vadd.f32 %v1223, %v1828
    %v1830 = vpop.f32.mrf.mxu0
    %v1831 = vpop.f32.mrf.mxu0
    %1832 = vdwg.mxu0
    %v1833 = vxor.u32 %v1745, 2147483648
    %v1834 = vxor.u32 %v1747, 2147483648
    %v1835 = vxor.u32 %v1786, 2147483648
    %v1836 = vxor.u32 %v1788, 2147483648
    %v1837 = vxor.u32 %v1827, 2147483648
    %v1838 = vxor.u32 %v1829, 2147483648
    %v1839 = vmul.f32 %v1833, 1.442695
    %v1840 = vpow.pop %v1839
    %v1841 = vmul.f32 %v1834, 1.442695
    %v1842 = vpow.pop %v1841
    %v1843 = vmul.f32 %v1835, 1.442695
    %v1844 = vpow.pop %v1843
    %v1845 = vmul.f32 %v1836, 1.442695
    %v1846 = vpow.pop %v1845
    %v1847 = vmul.f32 %v1837, 1.442695
    %v1848 = vpow.pop %v1847
    %v1849 = vmul.f32 %v1838, 1.442695
    %v1850 = vpow.pop %v1849
    %v1851 = vadd.f32 %v1840, 1.0
    %v1852 = vadd.f32 %v1842, 1.0
    %v1853 = vadd.f32 %v1844, 1.0
    %v1854 = vadd.f32 %v1846, 1.0
    %v1855 = vadd.f32 %v1848, 1.0
    %v1856 = vadd.f32 %v1850, 1.0
    %v1857 = vrcp.pop %v1851
    %v1858 = vmul.f32 1.0, %v1857
    %v1859 = vrcp.pop %v1852
    %v1860 = vmul.f32 1.0, %v1859
    %v1861 = vrcp.pop %v1853
    %v1862 = vmul.f32 1.0, %v1861
    %v1863 = vrcp.pop %v1854
    %v1864 = vmul.f32 1.0, %v1863
    %v1865 = vrcp.pop %v1855
    %v1866 = vmul.f32 1.0, %v1865
    %v1867 = vrcp.pop %v1856
    %v1868 = vmul.f32 1.0, %v1867
    %1869 = vst [vmem:[%s11] sm:$0xff] %v1858
    %1870 = vst [vmem:[%s11 + $0x8] sm:$0xff] %v1860
    %1871 = vst [vmem:[%s11 + $0x10] sm:$0xff] %v1862
    %1872 = vst [vmem:[%s11 + $0x18] sm:$0xff] %v1864
    %1873 = vst [vmem:[%s11 + $0x20] sm:$0xff] %v1866
    %1874 = vst [vmem:[%s11 + $0x28] sm:$0xff] %v1868
    // Predicated region
    $region54: #{vae_forward.1} parent=1 // pred_check
      _
    $region55: #{vae_forward.1} parent=1 // pred_check_branch
      %1876 = sbr.rel (0) target = $region57
    $region56: #{vae_forward.1} parent=1 // pred_region
      _
    $region57: #{vae_forward.1} parent=1 // pred_fallthru
      _
    // Predicated region
    $region58: #{vae_forward.1} parent=1 // pred_check
      _
    $region59: #{vae_forward.1} parent=1 // pred_check_branch
      %1878 = sbr.rel (0) target = $region61
    $region60: #{vae_forward.1} parent=1 // pred_region
      _
    $region61: #{vae_forward.1} parent=1 // pred_fallthru
      _
    // Predicated region
    $region62: #{vae_forward.1} parent=1 // pred_check
      _
    $region63: #{vae_forward.1} parent=1 // pred_check_branch
      %1880 = sbr.rel (0) target = $region65
    $region64: #{vae_forward.1} parent=1 // pred_region
      _
    $region65: #{vae_forward.1} parent=1 // pred_fallthru
      _
    // Predicated region
    $region66: #{vae_forward.1} parent=1 // pred_check
      _
    $region67: #{vae_forward.1} parent=1 // pred_check_branch
      %1882 = sbr.rel (0) target = $region69
    $region68: #{vae_forward.1} parent=1 // pred_region
      _
    $region69: #{vae_forward.1} parent=1 // pred_fallthru
      _
    %1883 = vsyncpa [#allocation3], 1
    %1884 = vsyncpa [#allocation5], 1

</llo_original>
